<compile_context>
chip_gen: v7x
topology: tpu7x:2x2x1
jax: 0.10.0
libtpu: 0.0.40
codegen_flags: <defaults>
</compile_context>

<pallas_src>
import jax
import jax.numpy as jnp
from jax.experimental import pallas as pl
from jax.experimental.pallas import tpu as pltpu


def _se_kernel_mxu(x_ref, pool_ref, w1_ref, b1_ref, w2_ref, b2_ref, o_ref):
    # x_ref/o_ref: (Bt, HW, C); pool_ref: (Bt, Bt*HW) block-diagonal ones.
    bt, hw, c = x_ref.shape
    inv_hw = jnp.float32(1.0 / hw)

    # --- squeeze on the MXU: block-diagonal ones @ flattened tile ---------
    # f32 accumulation without materializing an f32 copy of the whole tile.
    # The reshape is a free shape-cast because HW % 8 == 0 (wrapper-checked).
    x2d = x_ref[...].reshape(bt * hw, c)
    y = jnp.dot(pool_ref[...], x2d,
                preferred_element_type=jnp.float32,
                precision=jax.lax.Precision.HIGHEST) * inv_hw          # (Bt, C)

    # --- excitation: FC -> ReLU -> FC -> sigmoid (tiny, f32 on MXU) -------
    h = jnp.dot(y, w1_ref[...], preferred_element_type=jnp.float32) + b1_ref[...]
    h = jnp.maximum(h, 0.0)                                            # (Bt, Cr)
    s = jnp.dot(h, w2_ref[...], preferred_element_type=jnp.float32) + b2_ref[...]
    s = jax.nn.sigmoid(s)                                              # (Bt, C)

    # --- scale: re-read the tile (x2d is dead after the squeeze dot, so the
    # big tile is never live across the MLP) and broadcast the gate over HW.
    o_ref[...] = x_ref[...] * s[:, None, :].astype(o_ref.dtype)


def _se_kernel_vpu(x_ref, w1_ref, b1_ref, w2_ref, b2_ref, o_ref):
    # Fallback when HW % 8 != 0 (flattening for the MXU would need a relayout).
    y = jnp.mean(x_ref[...].astype(jnp.float32), axis=1)               # (Bt, C)
    h = jnp.maximum(
        jnp.dot(y, w1_ref[...], preferred_element_type=jnp.float32) + b1_ref[...], 0.0)
    s = jax.nn.sigmoid(
        jnp.dot(h, w2_ref[...], preferred_element_type=jnp.float32) + b2_ref[...])
    o_ref[...] = x_ref[...] * s[:, None, :].astype(o_ref.dtype)


def se_block_channels_last(x, w1, b1, w2, b2):
    """SEBlock forward on channels-last activations (no layout passes).

    x  : (B, HW, C)   channel axis on the 128-lane dimension
    w1 : (Cr, C), b1: (Cr,)    nn.Linear(channels, channels//reduction)
    w2 : (C, Cr), b2: (C,)     nn.Linear(channels//reduction, channels)
    """
    B, HW, C = x.shape
    Cr = w1.shape[0]
    itemsize = jnp.dtype(x.dtype).itemsize

    # PyTorch Linear computes y = x @ W.T + b -> pass transposed weights.
    # No Cr padding: weight BlockSpecs cover the full arrays, so the (8,128)
    # divisibility rule does not apply; padding would only inflate DMA.
    w1_t = jnp.transpose(w1).astype(jnp.float32)       # (C, Cr)
    b1_2d = b1.reshape(1, Cr).astype(jnp.float32)      # (1, Cr)
    w2_t = jnp.transpose(w2).astype(jnp.float32)       # (Cr, C)
    b2_2d = b2.reshape(1, C).astype(jnp.float32)       # (1, C)
    weight_bytes = (C * Cr + Cr + Cr * C + C) * 4

    use_mxu_squeeze = (HW % 8 == 0)

    # --- VMEM budget derived from the chip (v7x only has 64 MiB per core) ---
    try:
        vmem_cap = pltpu.get_tpu_info().vmem_capacity_bytes
    except Exception:
        vmem_cap = 64 * 2**20                          # conservative fallback
    vmem_budget = max(4 * 2**20, vmem_cap - 8 * 2**20)

    per_sample_bytes = HW * C * itemsize

    def vmem_needed(bt):
        blk = bt * per_sample_bytes
        pool_bytes = bt * bt * HW * itemsize if use_mxu_squeeze else 0
        f32_tmp = bt * HW * C * 4                      # in-kernel gate-broadcast temps
        return 4 * blk + 2 * pool_bytes + 2 * weight_bytes + f32_tmp + (2 << 20)

    # Batch tile: largest divisor of B whose x block stays near the 1-4 MiB
    # sweet spot and fits the VMEM budget, keeping >= 2 grid steps (when B >= 2)
    # so both v7x TensorCores get work; the extra step costs ~0.35us on 1-TC
    # chips, negligible at these block sizes.
    target_block_bytes = 4 * 2**20
    bt = 1
    for d in range(1, B + 1):
        if B % d:
            continue
        if d > 1 and d * per_sample_bytes > target_block_bytes:
            break
        if vmem_needed(d) > vmem_budget:
            break
        if B >= 2 and B // d < 2:
            break
        bt = d
    grid = B // bt
    vmem_limit = int(min(vmem_budget, max(4 * 2**20, vmem_needed(bt))))

    cost = pl.CostEstimate(
        flops=B * (2 * HW * C + 2 * C * Cr + 2 * Cr * C + HW * C),
        transcendentals=B * C,                         # sigmoid
        bytes_accessed=2 * B * HW * C * itemsize + weight_bytes,
    )

    x_spec = pl.BlockSpec((bt, HW, C), lambda b: (b, 0, 0))
    w_specs = [
        pl.BlockSpec((C, Cr), lambda b: (0, 0)),
        pl.BlockSpec((1, Cr), lambda b: (0, 0)),
        pl.BlockSpec((Cr, C), lambda b: (0, 0)),
        pl.BlockSpec((1, C), lambda b: (0, 0)),
    ]
    if use_mxu_squeeze:
        # Block-diagonal ones: row b sums sample b's HW rows on the MXU.
        pool = (jnp.arange(bt)[:, None] == (jnp.arange(bt * HW)[None, :] // HW))
        pool = pool.astype(x.dtype)                                    # (bt, bt*HW)
        kernel = _se_kernel_mxu
        in_specs = [x_spec, pl.BlockSpec((bt, bt * HW), lambda b: (0, 0))] + w_specs
        args = (x, pool, w1_t, b1_2d, w2_t, b2_2d)
    else:
        kernel = _se_kernel_vpu
        in_specs = [x_spec] + w_specs
        args = (x, w1_t, b1_2d, w2_t, b2_2d)

    # NOTE: if a single sample's HW*C block ever exceeds the VMEM budget (hit
    # first on v7x's 64 MiB), the scalable path is an extra "arbitrary" grid
    # axis over HW tiles accumulating channel sums into scratch, then a second
    # pass for the scale multiply.  Not needed at SE-typical sizes.
    return pl.pallas_call(
        kernel,
        out_shape=jax.ShapeDtypeStruct((B, HW, C), x.dtype),
        grid=(grid,),
        in_specs=in_specs,
        out_specs=pl.BlockSpec((bt, HW, C), lambda b: (b, 0, 0)),
        compiler_params=pltpu.CompilerParams(
            dimension_semantics=("parallel",),
            vmem_limit_bytes=vmem_limit,
        ),
        cost_estimate=cost,
    )(*args)


def se_block(x_nchw, w1, b1, w2, b2):
    """Drop-in NCHW entry point matching the PyTorch module.

    The NCHW<->channels-last transposes here are full HBM read+write passes by
    XLA; models that already keep activations channels-last should call
    se_block_channels_last directly and skip them.
    """
    B, C, H, W = x_nchw.shape
    x = jnp.transpose(x_nchw, (0, 2, 3, 1)).reshape(B, H * W, C)
    out = se_block_channels_last(x, w1, b1, w2, b2)
    return jnp.transpose(out.reshape(B, H, W, C), (0, 3, 1, 2))


def se_block_ref(x, w1, b1, w2, b2):
    """Pure-JAX reference matching the PyTorch forward."""
    y = jnp.mean(x, axis=(2, 3))                      # AdaptiveAvgPool2d(1)
    h = jnp.maximum(y @ w1.T + b1, 0.0)
    s = jax.nn.sigmoid(h @ w2.T + b2)
    return x * s[:, :, None, None]


if __name__ == "__main__":
    # SE-typical small config: C a multiple of 128 (lane-dense, unmasked stores),
    # HW a multiple of 8 (MXU squeeze path), B large enough that Bt > 1 and the
    # grid still has >= 2 steps.
    B, C, H, W = 8, 128, 8, 8
    reduction = 16
    Cr = C // reduction

    key = jax.random.PRNGKey(0)
    kx, k1, k2, k3, k4 = jax.random.split(key, 5)

    x = jax.random.normal(kx, (B, C, H, W), dtype=jnp.float32)
    # Deterministic synthetic parameters (shapes match nn.Linear weights).
    w1 = jax.random.normal(k1, (Cr, C), dtype=jnp.float32) * 0.1
    b1 = jax.random.normal(k2, (Cr,), dtype=jnp.float32) * 0.1
    w2 = jax.random.normal(k3, (C, Cr), dtype=jnp.float32) * 0.1
    b2 = jax.random.normal(k4, (C,), dtype=jnp.float32) * 0.1

    out = jax.block_until_ready(se_block(x, w1, b1, w2, b2))

    ref = se_block_ref(x, w1, b1, w2, b2)
    assert out.shape == (B, C, H, W)
    assert jnp.allclose(out, ref, atol=1e-3, rtol=1e-3), "mismatch vs reference"

    print("KERNEL_OK")
</pallas_src>

<mosaic_0001>
module attributes {stable_mosaic.version = 11 : i64} {
  func.func @_se_kernel_mxu(%arg0: i32, %arg1: memref<4x64x128xf32, #tpu.memory_space<vmem>>, %arg2: memref<4x256xf32, #tpu.memory_space<vmem>>, %arg3: memref<128x8xf32, #tpu.memory_space<vmem>>, %arg4: memref<1x8xf32, #tpu.memory_space<vmem>>, %arg5: memref<8x128xf32, #tpu.memory_space<vmem>>, %arg6: memref<1x128xf32, #tpu.memory_space<vmem>>, %arg7: memref<4x64x128xf32, #tpu.memory_space<vmem>>) attributes {dimension_semantics = [#tpu.dimension_semantics<parallel>], iteration_bounds = array<i64: 2>, scalar_prefetch = 0 : i64, scratch_operands = 0 : i64, tpu.core_type = #tpu.core_type<tc>, window_params = [{transform_indices = @transform_0, window_bounds = array<i64: 4, 64, 128>}, {pipeline_mode = #tpu.pipeline_mode<synchronous>, transform_indices = @transform_1, window_bounds = array<i64: 4, 256>}, {pipeline_mode = #tpu.pipeline_mode<synchronous>, transform_indices = @transform_2, window_bounds = array<i64: 128, 8>}, {pipeline_mode = #tpu.pipeline_mode<synchronous>, transform_indices = @transform_3, window_bounds = array<i64: 1, 8>}, {pipeline_mode = #tpu.pipeline_mode<synchronous>, transform_indices = @transform_4, window_bounds = array<i64: 8, 128>}, {pipeline_mode = #tpu.pipeline_mode<synchronous>, transform_indices = @transform_5, window_bounds = array<i64: 1, 128>}, {transform_indices = @transform_6, window_bounds = array<i64: 4, 64, 128>}]} {
    %c0 = arith.constant 0 : index
    %c0_0 = arith.constant 0 : index
    %c0_1 = arith.constant 0 : index
    %0 = vector.load %arg1[%c0, %c0_0, %c0_1] : memref<4x64x128xf32, #tpu.memory_space<vmem>>, vector<4x64x128xf32>
    %1 = vector.shape_cast %0 : vector<4x64x128xf32> to vector<256x128xf32>
    %c0_2 = arith.constant 0 : index
    %c0_3 = arith.constant 0 : index
    %2 = vector.load %arg2[%c0_2, %c0_3] : memref<4x256xf32, #tpu.memory_space<vmem>>, vector<4x256xf32>
    %cst = arith.constant dense<0.000000e+00> : vector<4x128xf32>
    %3 = tpu.matmul %2, %1, %cst {dimension_numbers = #tpu.dot_dimension_numbers<[1], [0], [0], [1], [0, 0, 1, 1], [], []>, precision = #tpu.contract_precision<fp32>} : vector<4x256xf32>, vector<256x128xf32>, vector<4x128xf32> -> vector<4x128xf32>
    %cst_4 = arith.constant 1.562500e-02 : f32
    %4 = vector.broadcast %cst_4 : f32 to vector<4x128xf32>
    %5 = arith.mulf %3, %4 : vector<4x128xf32>
    %c0_5 = arith.constant 0 : index
    %c0_6 = arith.constant 0 : index
    %6 = vector.load %arg3[%c0_5, %c0_6] : memref<128x8xf32, #tpu.memory_space<vmem>>, vector<128x8xf32>
    %cst_7 = arith.constant dense<0.000000e+00> : vector<4x8xf32>
    %7 = tpu.matmul %5, %6, %cst_7 {dimension_numbers = #tpu.dot_dimension_numbers<[1], [0], [0], [1], [0, 0, 1, 1], [], []>} : vector<4x128xf32>, vector<128x8xf32>, vector<4x8xf32> -> vector<4x8xf32>
    %c0_8 = arith.constant 0 : index
    %c0_9 = arith.constant 0 : index
    %8 = vector.load %arg4[%c0_8, %c0_9] : memref<1x8xf32, #tpu.memory_space<vmem>>, vector<1x8xf32>
    %9 = vector.broadcast %8 : vector<1x8xf32> to vector<4x8xf32>
    %10 = arith.addf %7, %9 : vector<4x8xf32>
    %cst_10 = arith.constant 0.000000e+00 : f32
    %11 = vector.broadcast %cst_10 : f32 to vector<4x8xf32>
    %12 = arith.maximumf %10, %11 : vector<4x8xf32>
    %c0_11 = arith.constant 0 : index
    %c0_12 = arith.constant 0 : index
    %13 = vector.load %arg5[%c0_11, %c0_12] : memref<8x128xf32, #tpu.memory_space<vmem>>, vector<8x128xf32>
    %cst_13 = arith.constant dense<0.000000e+00> : vector<4x128xf32>
    %14 = tpu.matmul %12, %13, %cst_13 {dimension_numbers = #tpu.dot_dimension_numbers<[1], [0], [0], [1], [0, 0, 1, 1], [], []>} : vector<4x8xf32>, vector<8x128xf32>, vector<4x128xf32> -> vector<4x128xf32>
    %c0_14 = arith.constant 0 : index
    %c0_15 = arith.constant 0 : index
    %15 = vector.load %arg6[%c0_14, %c0_15] : memref<1x128xf32, #tpu.memory_space<vmem>>, vector<1x128xf32>
    %16 = vector.broadcast %15 : vector<1x128xf32> to vector<4x128xf32>
    %17 = arith.addf %14, %16 : vector<4x128xf32>
    %18 = arith.negf %17 : vector<4x128xf32>
    %19 = math.exp %18 : vector<4x128xf32>
    %cst_16 = arith.constant 1.000000e+00 : f32
    %20 = vector.broadcast %cst_16 : f32 to vector<4x128xf32>
    %21 = arith.addf %20, %19 : vector<4x128xf32>
    %22 = arith.divf %20, %21 : vector<4x128xf32>
    %c0_17 = arith.constant 0 : index
    %c0_18 = arith.constant 0 : index
    %c0_19 = arith.constant 0 : index
    %23 = vector.load %arg1[%c0_17, %c0_18, %c0_19] : memref<4x64x128xf32, #tpu.memory_space<vmem>>, vector<4x64x128xf32>
    %24 = vector.shape_cast %22 : vector<4x128xf32> to vector<4x1x128xf32>
    %25 = vector.broadcast %24 : vector<4x1x128xf32> to vector<4x64x128xf32>
    %26 = arith.mulf %23, %25 : vector<4x64x128xf32>
    %c0_20 = arith.constant 0 : index
    %c0_21 = arith.constant 0 : index
    %c0_22 = arith.constant 0 : index
    %27 = vector.load %arg7[%c0_20, %c0_21, %c0_22] : memref<4x64x128xf32, #tpu.memory_space<vmem>>, vector<4x64x128xf32>
    tpu.vector_store %arg7[%c0_20, %c0_21, %c0_22], %26 {strides = array<i32>} : memref<4x64x128xf32, #tpu.memory_space<vmem>>, vector<4x64x128xf32>,
    return
  }
  func.func @transform_0(%arg0: i32) -> (i32, i32, i32) {
    %c0_i32 = arith.constant 0 : i32
    %c0_i32_0 = arith.constant 0 : i32
    %c0_i32_1 = arith.constant 0 : i32
    return %arg0, %c0_i32, %c0_i32_0 : i32, i32, i32
  }
  func.func @transform_1(%arg0: i32) -> (i32, i32) {
    %c0_i32 = arith.constant 0 : i32
    %c0_i32_0 = arith.constant 0 : i32
    %c0_i32_1 = arith.constant 0 : i32
    return %c0_i32, %c0_i32_0 : i32, i32
  }
  func.func @transform_2(%arg0: i32) -> (i32, i32) {
    %c0_i32 = arith.constant 0 : i32
    %c0_i32_0 = arith.constant 0 : i32
    %c0_i32_1 = arith.constant 0 : i32
    return %c0_i32, %c0_i32_0 : i32, i32
  }
  func.func @transform_3(%arg0: i32) -> (i32, i32) {
    %c0_i32 = arith.constant 0 : i32
    %c0_i32_0 = arith.constant 0 : i32
    %c0_i32_1 = arith.constant 0 : i32
    return %c0_i32, %c0_i32_0 : i32, i32
  }
  func.func @transform_4(%arg0: i32) -> (i32, i32) {
    %c0_i32 = arith.constant 0 : i32
    %c0_i32_0 = arith.constant 0 : i32
    %c0_i32_1 = arith.constant 0 : i32
    return %c0_i32, %c0_i32_0 : i32, i32
  }
  func.func @transform_5(%arg0: i32) -> (i32, i32) {
    %c0_i32 = arith.constant 0 : i32
    %c0_i32_0 = arith.constant 0 : i32
    %c0_i32_1 = arith.constant 0 : i32
    return %c0_i32, %c0_i32_0 : i32, i32
  }
  func.func @transform_6(%arg0: i32) -> (i32, i32, i32) {
    %c0_i32 = arith.constant 0 : i32
    %c0_i32_0 = arith.constant 0 : i32
    %c0_i32_1 = arith.constant 0 : i32
    return %arg0, %c0_i32, %c0_i32_0 : i32, i32, i32
  }
}

</mosaic_0001>

<llo_original>
// kernel: tpu_custom_call.1
$region0: #{tpu_custom_call.1}
  #allocation0 [shape = 'u32[]', space=smem, size = 0x4, offset = 0x4, fixed_abs, tag = 'smem constant byte address 0x4 - core index']
  #allocation1 [shape = 'u32[144,128]{1,0:T(1,128)}', space=vmem, size = 0x12000, scoped, tag = 'internal scratch']
  %s0 = inlined_call_operand.hbm [shape: f32[8,64,128], index: 0, kind: input, shape index: {}]
  %s1 = inlined_call_operand.vmem [shape: f32[4,256], index: 1, kind: input, shape index: {}]
  %s2 = inlined_call_operand.vmem [shape: f32[128,8], index: 2, kind: input, shape index: {}]
  %s3 = inlined_call_operand.vmem [shape: f32[1,8], index: 3, kind: input, shape index: {}]
  %s4 = inlined_call_operand.vmem [shape: f32[8,128], index: 4, kind: input, shape index: {}]
  %s5 = inlined_call_operand.vmem [shape: f32[1,128], index: 5, kind: input, shape index: {}]
  %s6 = inlined_call_operand.hbm [shape: f32[8,64,128], index: 6, kind: output, shape index: {}]
  %s7 = sld [smem:[#allocation0]]
  $region61: #{tpu_custom_call.1} parent=0
    _
  %s9 = ssub.s32 1, %s7
  %s10 = scalar_select 0, %s9, %s7
  $region1: #{tpu_custom_call.1} parent=0
    #allocation2 [shape = 'u8[262144]{0}', space=vmem, size = 0x40000, scoped, tag = 'input window, operand 0']
    #allocation3 [shape = 's32[2]{0}', space=sflag, size = 0x8, scoped, tag = 'scoped memory for tpu_custom_call.1']
    #allocation4 [shape = 's32[2]{0}', space=sflag, size = 0x8, scoped, tag = 'scoped memory for tpu_custom_call.1']
    #allocation5 [shape = 'u8[262144]{0}', space=vmem, size = 0x40000, scoped, tag = 'output window, operand 0']
    %11 = vsyncpa [#allocation3], 0
    %s12 = scalar_lea.sflag [#allocation3], 1
    %13 = vsyncpa %s12, 0
    %14 = vsyncpa [#allocation4], 0
    %s15 = scalar_lea.sflag [#allocation4], 1
    %16 = vsyncpa %s15, 0
    loop: start=0, step=1, limit=4
    $region2: #{tpu_custom_call.1} parent=1 // loop_pre_header
      _
    $region3: #{tpu_custom_call.1} parent=1 // loop_header
      %s18 = sphi 0, %s22
      %p19 = scmp.ge.s32.totalorder %s18, 4
      %s28 = sphi 0, %s30
      %s31 = sphi 0, %s28
      %s32 = sphi 0, %s31
      %s48 = sphi 0, %s32
      %s52 = sphi 0, %s52
      %s54 = sphi 0, %s52
      %s55 = sphi 0, %s54
      %s69 = sphi 0, %s55
      %s73 = sphi 0, %s73
      %s75 = sphi 0, %s73
      %s76 = sphi 0, %s75
      %s90 = sphi 0, %s76
      %s94 = sphi 0, %s94
      %s96 = sphi 0, %s94
      %s97 = sphi 0, %s96
      %s111 = sphi 0, %s97
      %s115 = sphi 0, %s115
      %s117 = sphi 0, %s115
      %s118 = sphi 0, %s117
      %s132 = sphi 0, %s118
      %s136 = sphi 0, %s136
      %s138 = sphi 0, %s136
      %s139 = sphi 0, %s138
      %s153 = sphi 0, %s139
      %s159 = sphi 0, %s161
      %s162 = sphi 0, %s159
      %s163 = sphi 0, %s162
      %s179 = sphi 0, %s163
    $region4: #{tpu_custom_call.1} parent=1 // loop_header_branch
      %21 = sbr.rel (%p19) target = $region8
    $region5: #{tpu_custom_call.1} parent=1 // loop_body
      %s23 = ssub.s32 %s18, 1
      %s24 = ssub.s32 %s18, 2
      %s25 = sadd.s32 %s18, 1
      %s26 = ssub.s32 %s18, %s25
      %p27 = scmp.eq.s32.totalorder %s26, 0
      %s29 = sadd.s32 %s28, 1
      %s30 = scalar_select %p27, %s28, %s29
      %p33 = pneg %p27
      %p34 = scmp.eq.s32.totalorder %s18, 1
      %p35 = por %p33, %p34
      %p36 = scmp.ne.s32.totalorder %s28, %s31
      %p37 = scmp.eq.s32.totalorder %s18, 0
      %p38 = por %p36, %p37
      %p39 = scmp.ne.s32.totalorder %s28, %s31
      %p40 = scmp.eq.s32.totalorder %s23, 1
      %p41 = por %p39, %p40
      %p42 = scmp.ne.s32.totalorder %s31, %s32
      %p43 = scmp.eq.s32.totalorder %s23, 0
      %p44 = por %p42, %p43
      %p45 = scmp.ne.s32.totalorder %s31, %s32
      %p46 = scmp.eq.s32.totalorder %s24, 1
      %p47 = por %p45, %p46
      %p49 = scmp.ne.s32.totalorder %s32, %s48
      %p50 = scmp.eq.s32.totalorder %s24, 0
      %p51 = por %p49, %p50
      %s53 = sadd.s32 %s52, 1
      %p56 = scmp.eq.s32.totalorder %s18, 1
      %p57 = scmp.ne.s32.totalorder %s52, %s54
      %p58 = scmp.eq.s32.totalorder %s18, 0
      %p59 = por %p57, %p58
      %p60 = scmp.ne.s32.totalorder %s52, %s54
      %p61 = scmp.eq.s32.totalorder %s23, 1
      %p62 = por %p60, %p61
      %p63 = scmp.ne.s32.totalorder %s54, %s55
      %p64 = scmp.eq.s32.totalorder %s23, 0
      %p65 = por %p63, %p64
      %p66 = scmp.ne.s32.totalorder %s54, %s55
      %p67 = scmp.eq.s32.totalorder %s24, 1
      %p68 = por %p66, %p67
      %p70 = scmp.ne.s32.totalorder %s55, %s69
      %p71 = scmp.eq.s32.totalorder %s24, 0
      %p72 = por %p70, %p71
      %s74 = sadd.s32 %s73, 1
      %p77 = scmp.eq.s32.totalorder %s18, 1
      %p78 = scmp.ne.s32.totalorder %s73, %s75
      %p79 = scmp.eq.s32.totalorder %s18, 0
      %p80 = por %p78, %p79
      %p81 = scmp.ne.s32.totalorder %s73, %s75
      %p82 = scmp.eq.s32.totalorder %s23, 1
      %p83 = por %p81, %p82
      %p84 = scmp.ne.s32.totalorder %s75, %s76
      %p85 = scmp.eq.s32.totalorder %s23, 0
      %p86 = por %p84, %p85
      %p87 = scmp.ne.s32.totalorder %s75, %s76
      %p88 = scmp.eq.s32.totalorder %s24, 1
      %p89 = por %p87, %p88
      %p91 = scmp.ne.s32.totalorder %s76, %s90
      %p92 = scmp.eq.s32.totalorder %s24, 0
      %p93 = por %p91, %p92
      %s95 = sadd.s32 %s94, 1
      %p98 = scmp.eq.s32.totalorder %s18, 1
      %p99 = scmp.ne.s32.totalorder %s94, %s96
      %p100 = scmp.eq.s32.totalorder %s18, 0
      %p101 = por %p99, %p100
      %p102 = scmp.ne.s32.totalorder %s94, %s96
      %p103 = scmp.eq.s32.totalorder %s23, 1
      %p104 = por %p102, %p103
      %p105 = scmp.ne.s32.totalorder %s96, %s97
      %p106 = scmp.eq.s32.totalorder %s23, 0
      %p107 = por %p105, %p106
      %p108 = scmp.ne.s32.totalorder %s96, %s97
      %p109 = scmp.eq.s32.totalorder %s24, 1
      %p110 = por %p108, %p109
      %p112 = scmp.ne.s32.totalorder %s97, %s111
      %p113 = scmp.eq.s32.totalorder %s24, 0
      %p114 = por %p112, %p113
      %s116 = sadd.s32 %s115, 1
      %p119 = scmp.eq.s32.totalorder %s18, 1
      %p120 = scmp.ne.s32.totalorder %s115, %s117
      %p121 = scmp.eq.s32.totalorder %s18, 0
      %p122 = por %p120, %p121
      %p123 = scmp.ne.s32.totalorder %s115, %s117
      %p124 = scmp.eq.s32.totalorder %s23, 1
      %p125 = por %p123, %p124
      %p126 = scmp.ne.s32.totalorder %s117, %s118
      %p127 = scmp.eq.s32.totalorder %s23, 0
      %p128 = por %p126, %p127
      %p129 = scmp.ne.s32.totalorder %s117, %s118
      %p130 = scmp.eq.s32.totalorder %s24, 1
      %p131 = por %p129, %p130
      %p133 = scmp.ne.s32.totalorder %s118, %s132
      %p134 = scmp.eq.s32.totalorder %s24, 0
      %p135 = por %p133, %p134
      %s137 = sadd.s32 %s136, 1
      %p140 = scmp.eq.s32.totalorder %s18, 1
      %p141 = scmp.ne.s32.totalorder %s136, %s138
      %p142 = scmp.eq.s32.totalorder %s18, 0
      %p143 = por %p141, %p142
      %p144 = scmp.ne.s32.totalorder %s136, %s138
      %p145 = scmp.eq.s32.totalorder %s23, 1
      %p146 = por %p144, %p145
      %p147 = scmp.ne.s32.totalorder %s138, %s139
      %p148 = scmp.eq.s32.totalorder %s23, 0
      %p149 = por %p147, %p148
      %p150 = scmp.ne.s32.totalorder %s138, %s139
      %p151 = scmp.eq.s32.totalorder %s24, 1
      %p152 = por %p150, %p151
      %p154 = scmp.ne.s32.totalorder %s139, %s153
      %p155 = scmp.eq.s32.totalorder %s24, 0
      %p156 = por %p154, %p155
      %s157 = ssub.s32 %s18, %s25
      %p158 = scmp.eq.s32.totalorder %s157, 0
      %s160 = sadd.s32 %s159, 1
      %s161 = scalar_select %p158, %s159, %s160
      %p164 = pneg %p158
      %p165 = scmp.eq.s32.totalorder %s18, 1
      %p166 = por %p164, %p165
      %p167 = scmp.ne.s32.totalorder %s159, %s162
      %p168 = scmp.eq.s32.totalorder %s18, 0
      %p169 = por %p167, %p168
      %p170 = scmp.ne.s32.totalorder %s159, %s162
      %p171 = scmp.eq.s32.totalorder %s23, 1
      %p172 = por %p170, %p171
      %p173 = scmp.ne.s32.totalorder %s162, %s163
      %p174 = scmp.eq.s32.totalorder %s23, 0
      %p175 = por %p173, %p174
      %p176 = scmp.ne.s32.totalorder %s162, %s163
      %p177 = scmp.eq.s32.totalorder %s24, 1
      %p178 = por %p176, %p177
      %p180 = scmp.ne.s32.totalorder %s163, %s179
      %p181 = scmp.eq.s32.totalorder %s24, 0
      %p182 = por %p180, %p181
      %p183 = scmp.le.s32.totalorder 1, %s18
      %p184 = scmp.lt.s32.totalorder %s18, 3
      %p185 = pnand %p183, %p184
      %p186 = pneg %p185
      // Predicated region
      $region9: #{tpu_custom_call.1} parent=5 // pred_check
        _
      $region10: #{tpu_custom_call.1} parent=5 // pred_check_branch
        %188 = sbr.rel (%p185) target = $region12
      $region11: #{tpu_custom_call.1} parent=5 // pred_region
        %s189 = ssub.s32 %s18, 1
        // Predicated region
        $region13: #{tpu_custom_call.1} parent=11 // pred_check
          %p190 = pneg %p65
        $region14: #{tpu_custom_call.1} parent=11 // pred_check_branch
          %192 = sbr.rel (%p190) target = $region16
        $region15: #{tpu_custom_call.1} parent=11 // pred_region
          _
        $region16: #{tpu_custom_call.1} parent=11 // pred_fallthru
          _
        // Predicated region
        $region17: #{tpu_custom_call.1} parent=11 // pred_check
          %p193 = pneg %p86
        $region18: #{tpu_custom_call.1} parent=11 // pred_check_branch
          %195 = sbr.rel (%p193) target = $region20
        $region19: #{tpu_custom_call.1} parent=11 // pred_region
          _
        $region20: #{tpu_custom_call.1} parent=11 // pred_fallthru
          _
        // Predicated region
        $region21: #{tpu_custom_call.1} parent=11 // pred_check
          %p196 = pneg %p107
        $region22: #{tpu_custom_call.1} parent=11 // pred_check_branch
          %198 = sbr.rel (%p196) target = $region24
        $region23: #{tpu_custom_call.1} parent=11 // pred_region
          _
        $region24: #{tpu_custom_call.1} parent=11 // pred_fallthru
          _
        // Predicated region
        $region25: #{tpu_custom_call.1} parent=11 // pred_check
          %p199 = pneg %p128
        $region26: #{tpu_custom_call.1} parent=11 // pred_check_branch
          %201 = sbr.rel (%p199) target = $region28
        $region27: #{tpu_custom_call.1} parent=11 // pred_region
          _
        $region28: #{tpu_custom_call.1} parent=11 // pred_fallthru
          _
        // Predicated region
        $region29: #{tpu_custom_call.1} parent=11 // pred_check
          %p202 = pneg %p149
        $region30: #{tpu_custom_call.1} parent=11 // pred_check_branch
          %204 = sbr.rel (%p202) target = $region32
        $region31: #{tpu_custom_call.1} parent=11 // pred_region
          _
        $region32: #{tpu_custom_call.1} parent=11 // pred_fallthru
          _
      $region12: #{tpu_custom_call.1} parent=5 // pred_fallthru
        _
      %p205 = scmp.lt.s32.totalorder %s18, 2
      // Predicated region
      $region33: #{tpu_custom_call.1} parent=5 // pred_check
        %p206 = pneg %p205
      $region34: #{tpu_custom_call.1} parent=5 // pred_check_branch
        %208 = sbr.rel (%p206) target = $region36
      $region35: #{tpu_custom_call.1} parent=5 // pred_region
        // Predicated region
        $region37: #{tpu_custom_call.1} parent=35 // pred_check
          %p209 = pneg %p38
        $region38: #{tpu_custom_call.1} parent=35 // pred_check_branch
          %211 = sbr.rel (%p209) target = $region40
        $region39: #{tpu_custom_call.1} parent=35 // pred_region
          %s212 = sand.u32 %s28, 1
          %s213 = scalar_lea.sflag [#allocation3], %s212
          %s214 = sand.u32 %s28, 1
          %s215 = smul.addr %s214, 256
          %s216 = scalar_lea.vmem [#allocation2], %s215
          %s217 = smul.u32 4, %s18
          %s219 = ssub.s32 4096, 4096
          %220 = vsyncadd %s213, %s219
          %s221 = smul.addr %s217, 8
          %s222 = smul.addr %s221, 128
          %s223 = scalar_lea.hbm %s0, %s222
          %s224 = sshll.u32 %s216, 4
          %s225 = int_to_ptr.vmem [resolvable:$true] %s224
          %230 = dma.hbm_to_vmem [thread:$0]  %s223, 4096, %s225, %s213, 128, 128, 8
        $region40: #{tpu_custom_call.1} parent=35 // pred_fallthru
          _
      $region36: #{tpu_custom_call.1} parent=5 // pred_fallthru
        _
      %p231 = scmp.le.s32.totalorder 1, %s18
      %p232 = scmp.lt.s32.totalorder %s18, 3
      %p233 = pnand %p231, %p232
      %p234 = pneg %p233
      // Predicated region
      $region41: #{tpu_custom_call.1} parent=5 // pred_check
        _
      $region42: #{tpu_custom_call.1} parent=5 // pred_check_branch
        %236 = sbr.rel (%p233) target = $region44
      $region43: #{tpu_custom_call.1} parent=5 // pred_region
        %s237 = ssub.s32 %s18, 1
        %s238 = sand.u32 %s31, 1
        %s239 = scalar_lea.sflag [#allocation3], %s238
        %s240 = sand.u32 %s31, 1
        %s241 = smul.addr %s240, 256
        %s242 = scalar_lea.vmem [#allocation2], %s241
        // Predicated region
        $region45: #{tpu_custom_call.1} parent=43 // pred_check
          %p243 = pneg %p44
        $region46: #{tpu_custom_call.1} parent=43 // pred_check_branch
          %245 = sbr.rel (%p243) target = $region48
        $region47: #{tpu_custom_call.1} parent=43 // pred_region
          %246 = dma.done %s239, 4096
        $region48: #{tpu_custom_call.1} parent=43 // pred_fallthru
          _
        %s247 = sand.u32 %s31, 1
        %s248 = scalar_lea.sflag [#allocation3], %s247
        %s249 = sand.u32 %s31, 1
        %s250 = smul.addr %s249, 256
        %s251 = scalar_lea.vmem [#allocation2], %s250
        %p252 = pneg %p44
        %p253 = pneg %p41
        %p254 = pneg %p65
        %p255 = pneg %p62
        %p256 = pneg %p86
        %p257 = pneg %p83
        %p258 = pneg %p107
        %p259 = pneg %p104
        %p260 = pneg %p128
        %p261 = pneg %p125
        %p262 = pneg %p149
        %p263 = pneg %p146
        %p264 = pneg %p175
        %p265 = pneg %p172
        %s266 = sand.u32 %s162, 1
        %s267 = scalar_lea.sflag [#allocation4], %s266
        %s268 = sand.u32 %s162, 1
        %s269 = smul.addr %s268, 256
        %s270 = scalar_lea.vmem [#allocation5], %s269
        %s271 = smul.u32 4, %s23
        %s272 = smul.u32 4, %s23
        %v273 = vld [vmem:[%s242] sm:$0xff]
        %v274 = vld [vmem:[%s242 + $0x8] sm:$0xff]
        %v275 = vld [vmem:[%s242 + $0x10] sm:$0xff]
        %v276 = vld [vmem:[%s242 + $0x18] sm:$0xff]
        %v277 = vld [vmem:[%s242 + $0x20] sm:$0xff]
        %v278 = vld [vmem:[%s242 + $0x28] sm:$0xff]
        %v279 = vld [vmem:[%s242 + $0x30] sm:$0xff]
        %v280 = vld [vmem:[%s242 + $0x38] sm:$0xff]
        %v281 = vld [vmem:[%s242 + $0x40] sm:$0xff]
        %v282 = vld [vmem:[%s242 + $0x48] sm:$0xff]
        %v283 = vld [vmem:[%s242 + $0x50] sm:$0xff]
        %v284 = vld [vmem:[%s242 + $0x58] sm:$0xff]
        %v285 = vld [vmem:[%s242 + $0x60] sm:$0xff]
        %v286 = vld [vmem:[%s242 + $0x68] sm:$0xff]
        %v287 = vld [vmem:[%s242 + $0x70] sm:$0xff]
        %v288 = vld [vmem:[%s242 + $0x78] sm:$0xff]
        %v289 = vld [vmem:[%s242 + $0x80] sm:$0xff]
        %v290 = vld [vmem:[%s242 + $0x88] sm:$0xff]
        %v291 = vld [vmem:[%s242 + $0x90] sm:$0xff]
        %v292 = vld [vmem:[%s242 + $0x98] sm:$0xff]
        %v293 = vld [vmem:[%s242 + $0xa0] sm:$0xff]
        %v294 = vld [vmem:[%s242 + $0xa8] sm:$0xff]
        %v295 = vld [vmem:[%s242 + $0xb0] sm:$0xff]
        %v296 = vld [vmem:[%s242 + $0xb8] sm:$0xff]
        %v297 = vld [vmem:[%s242 + $0xc0] sm:$0xff]
        %v298 = vld [vmem:[%s242 + $0xc8] sm:$0xff]
        %v299 = vld [vmem:[%s242 + $0xd0] sm:$0xff]
        %v300 = vld [vmem:[%s242 + $0xd8] sm:$0xff]
        %v301 = vld [vmem:[%s242 + $0xe0] sm:$0xff]
        %v302 = vld [vmem:[%s242 + $0xe8] sm:$0xff]
        %v303 = vld [vmem:[%s242 + $0xf0] sm:$0xff]
        %v304 = vld [vmem:[%s242 + $0xf8] sm:$0xff]
        %v305 = vld [vmem:[%s1] sm:$0xff]
        %v307 = vcombine.high %v305, %v305
        %309 = vmatprep.subr.mxu0 0.0
        %v310 = vand.u32 %v273, 4294901760
        %311 = vmatpush1.msra.mxu0 %v310
        %312 = vmatprep.subr.mxu0 0.0
        %v313 = vand.u32 %v274, 4294901760
        %314 = vmatpush1.msra.mxu0 %v313
        %315 = vmatprep.subr.mxu0 0.0
        %v316 = vand.u32 %v275, 4294901760
        %317 = vmatpush1.msra.mxu0 %v316
        %318 = vmatprep.subr.mxu0 0.0
        %v319 = vand.u32 %v276, 4294901760
        %320 = vmatpush1.msra.mxu0 %v319
        %321 = vmatprep.subr.mxu0 0.0
        %v322 = vand.u32 %v277, 4294901760
        %323 = vmatpush1.msra.mxu0 %v322
        %324 = vmatprep.subr.mxu0 0.0
        %v325 = vand.u32 %v278, 4294901760
        %326 = vmatpush1.msra.mxu0 %v325
        %327 = vmatprep.subr.mxu0 0.0
        %v328 = vand.u32 %v279, 4294901760
        %329 = vmatpush1.msra.mxu0 %v328
        %330 = vmatprep.subr.mxu0 0.0
        %v331 = vand.u32 %v280, 4294901760
        %332 = vmatpush1.msra.mxu0 %v331
        %333 = vmatprep.subr.mxu0 0.0
        %v334 = vand.u32 %v281, 4294901760
        %335 = vmatpush1.msra.mxu0 %v334
        %336 = vmatprep.subr.mxu0 0.0
        %v337 = vand.u32 %v282, 4294901760
        %338 = vmatpush1.msra.mxu0 %v337
        %339 = vmatprep.subr.mxu0 0.0
        %v340 = vand.u32 %v283, 4294901760
        %341 = vmatpush1.msra.mxu0 %v340
        %342 = vmatprep.subr.mxu0 0.0
        %v343 = vand.u32 %v284, 4294901760
        %344 = vmatpush1.msra.mxu0 %v343
        %345 = vmatprep.subr.mxu0 0.0
        %v346 = vand.u32 %v285, 4294901760
        %347 = vmatpush1.msra.mxu0 %v346
        %348 = vmatprep.subr.mxu0 0.0
        %v349 = vand.u32 %v286, 4294901760
        %350 = vmatpush1.msra.mxu0 %v349
        %351 = vmatprep.subr.mxu0 0.0
        %v352 = vand.u32 %v287, 4294901760
        %353 = vmatpush1.msra.mxu0 %v352
        %354 = vmatprep.subr.mxu0 0.0
        %v355 = vand.u32 %v288, 4294901760
        %356 = vmatpush1.msra.mxu0 %v355
        %357 = vmatprep.subr.mxu0 0.0
        %v358 = vand.u32 %v289, 4294901760
        %359 = vmatpush1.msra.mxu0 %v358
        %360 = vmatprep.subr.mxu0 0.0
        %v361 = vand.u32 %v290, 4294901760
        %362 = vmatpush1.msra.mxu0 %v361
        %363 = vmatprep.subr.mxu0 0.0
        %v364 = vand.u32 %v291, 4294901760
        %365 = vmatpush1.msra.mxu0 %v364
        %366 = vmatprep.subr.mxu0 0.0
        %v367 = vand.u32 %v292, 4294901760
        %368 = vmatpush1.msra.mxu0 %v367
        %369 = vmatprep.subr.mxu0 0.0
        %v370 = vand.u32 %v293, 4294901760
        %371 = vmatpush1.msra.mxu0 %v370
        %372 = vmatprep.subr.mxu0 0.0
        %v373 = vand.u32 %v294, 4294901760
        %374 = vmatpush1.msra.mxu0 %v373
        %375 = vmatprep.subr.mxu0 0.0
        %v376 = vand.u32 %v295, 4294901760
        %377 = vmatpush1.msra.mxu0 %v376
        %378 = vmatprep.subr.mxu0 0.0
        %v379 = vand.u32 %v296, 4294901760
        %380 = vmatpush1.msra.mxu0 %v379
        %381 = vmatprep.subr.mxu0 0.0
        %v382 = vand.u32 %v297, 4294901760
        %383 = vmatpush1.msra.mxu0 %v382
        %384 = vmatprep.subr.mxu0 0.0
        %v385 = vand.u32 %v298, 4294901760
        %386 = vmatpush1.msra.mxu0 %v385
        %387 = vmatprep.subr.mxu0 0.0
        %v388 = vand.u32 %v299, 4294901760
        %389 = vmatpush1.msra.mxu0 %v388
        %390 = vmatprep.subr.mxu0 0.0
        %v391 = vand.u32 %v300, 4294901760
        %392 = vmatpush1.msra.mxu0 %v391
        %393 = vmatprep.subr.mxu0 0.0
        %v394 = vand.u32 %v301, 4294901760
        %395 = vmatpush1.msra.mxu0 %v394
        %396 = vmatprep.subr.mxu0 0.0
        %v397 = vand.u32 %v302, 4294901760
        %398 = vmatpush1.msra.mxu0 %v397
        %399 = vmatprep.subr.mxu0 0.0
        %v400 = vand.u32 %v303, 4294901760
        %401 = vmatpush1.msra.mxu0 %v400
        %402 = vmatprep.subr.mxu0 0.0
        %v403 = vand.u32 %v304, 4294901760
        %404 = vmatpush1.msra.mxu0 %v403
        %v405 = vand.u32 %v307, 4294901760
        %v406 = vsub.f32 %v307, %v405
        %v407 = vand.u32 %v406, 4294901760
        %v408 = vsub.f32 %v406, %v407
        %v409 = vand.u32 %v408, 4294901760
        %410 = vmatprep.mubr.f32.mxu0 %v409
        %v411 = vand.u32 %v305, 4294901760
        %v412 = vsub.f32 %v305, %v411
        %v413 = vand.u32 %v412, 4294901760
        %v414 = vsub.f32 %v412, %v413
        %v415 = vand.u32 %v414, 4294901760
        %416 = vmatmul.mubr.f32.gmra.mrb[0].mxu0 %v415
        %v417 = vpop.f32.mrb[0].mxu0
        %v418 = vadd.f32 0.0, %v417
        %v419 = vpop.f32.mrb[0].mxu0
        %420 = vdwg.mxu0
        %421 = vmatprep.subr.mxu0 0.0
        %v422 = vand.u32 %v273, 4294901760
        %v423 = vsub.f32 %v273, %v422
        %v424 = vand.u32 %v423, 4294901760
        %v425 = vsub.f32 %v423, %v424
        %v426 = vand.u32 %v425, 4294901760
        %427 = vmatpush1.msra.mxu0 %v426
        %428 = vmatprep.subr.mxu0 0.0
        %v429 = vand.u32 %v274, 4294901760
        %v430 = vsub.f32 %v274, %v429
        %v431 = vand.u32 %v430, 4294901760
        %v432 = vsub.f32 %v430, %v431
        %v433 = vand.u32 %v432, 4294901760
        %434 = vmatpush1.msra.mxu0 %v433
        %435 = vmatprep.subr.mxu0 0.0
        %v436 = vand.u32 %v275, 4294901760
        %v437 = vsub.f32 %v275, %v436
        %v438 = vand.u32 %v437, 4294901760
        %v439 = vsub.f32 %v437, %v438
        %v440 = vand.u32 %v439, 4294901760
        %441 = vmatpush1.msra.mxu0 %v440
        %442 = vmatprep.subr.mxu0 0.0
        %v443 = vand.u32 %v276, 4294901760
        %v444 = vsub.f32 %v276, %v443
        %v445 = vand.u32 %v444, 4294901760
        %v446 = vsub.f32 %v444, %v445
        %v447 = vand.u32 %v446, 4294901760
        %448 = vmatpush1.msra.mxu0 %v447
        %449 = vmatprep.subr.mxu0 0.0
        %v450 = vand.u32 %v277, 4294901760
        %v451 = vsub.f32 %v277, %v450
        %v452 = vand.u32 %v451, 4294901760
        %v453 = vsub.f32 %v451, %v452
        %v454 = vand.u32 %v453, 4294901760
        %455 = vmatpush1.msra.mxu0 %v454
        %456 = vmatprep.subr.mxu0 0.0
        %v457 = vand.u32 %v278, 4294901760
        %v458 = vsub.f32 %v278, %v457
        %v459 = vand.u32 %v458, 4294901760
        %v460 = vsub.f32 %v458, %v459
        %v461 = vand.u32 %v460, 4294901760
        %462 = vmatpush1.msra.mxu0 %v461
        %463 = vmatprep.subr.mxu0 0.0
        %v464 = vand.u32 %v279, 4294901760
        %v465 = vsub.f32 %v279, %v464
        %v466 = vand.u32 %v465, 4294901760
        %v467 = vsub.f32 %v465, %v466
        %v468 = vand.u32 %v467, 4294901760
        %469 = vmatpush1.msra.mxu0 %v468
        %470 = vmatprep.subr.mxu0 0.0
        %v471 = vand.u32 %v280, 4294901760
        %v472 = vsub.f32 %v280, %v471
        %v473 = vand.u32 %v472, 4294901760
        %v474 = vsub.f32 %v472, %v473
        %v475 = vand.u32 %v474, 4294901760
        %476 = vmatpush1.msra.mxu0 %v475
        %477 = vmatprep.subr.mxu0 0.0
        %v478 = vand.u32 %v281, 4294901760
        %v479 = vsub.f32 %v281, %v478
        %v480 = vand.u32 %v479, 4294901760
        %v481 = vsub.f32 %v479, %v480
        %v482 = vand.u32 %v481, 4294901760
        %483 = vmatpush1.msra.mxu0 %v482
        %484 = vmatprep.subr.mxu0 0.0
        %v485 = vand.u32 %v282, 4294901760
        %v486 = vsub.f32 %v282, %v485
        %v487 = vand.u32 %v486, 4294901760
        %v488 = vsub.f32 %v486, %v487
        %v489 = vand.u32 %v488, 4294901760
        %490 = vmatpush1.msra.mxu0 %v489
        %491 = vmatprep.subr.mxu0 0.0
        %v492 = vand.u32 %v283, 4294901760
        %v493 = vsub.f32 %v283, %v492
        %v494 = vand.u32 %v493, 4294901760
        %v495 = vsub.f32 %v493, %v494
        %v496 = vand.u32 %v495, 4294901760
        %497 = vmatpush1.msra.mxu0 %v496
        %498 = vmatprep.subr.mxu0 0.0
        %v499 = vand.u32 %v284, 4294901760
        %v500 = vsub.f32 %v284, %v499
        %v501 = vand.u32 %v500, 4294901760
        %v502 = vsub.f32 %v500, %v501
        %v503 = vand.u32 %v502, 4294901760
        %504 = vmatpush1.msra.mxu0 %v503
        %505 = vmatprep.subr.mxu0 0.0
        %v506 = vand.u32 %v285, 4294901760
        %v507 = vsub.f32 %v285, %v506
        %v508 = vand.u32 %v507, 4294901760
        %v509 = vsub.f32 %v507, %v508
        %v510 = vand.u32 %v509, 4294901760
        %511 = vmatpush1.msra.mxu0 %v510
        %512 = vmatprep.subr.mxu0 0.0
        %v513 = vand.u32 %v286, 4294901760
        %v514 = vsub.f32 %v286, %v513
        %v515 = vand.u32 %v514, 4294901760
        %v516 = vsub.f32 %v514, %v515
        %v517 = vand.u32 %v516, 4294901760
        %518 = vmatpush1.msra.mxu0 %v517
        %519 = vmatprep.subr.mxu0 0.0
        %v520 = vand.u32 %v287, 4294901760
        %v521 = vsub.f32 %v287, %v520
        %v522 = vand.u32 %v521, 4294901760
        %v523 = vsub.f32 %v521, %v522
        %v524 = vand.u32 %v523, 4294901760
        %525 = vmatpush1.msra.mxu0 %v524
        %526 = vmatprep.subr.mxu0 0.0
        %v527 = vand.u32 %v288, 4294901760
        %v528 = vsub.f32 %v288, %v527
        %v529 = vand.u32 %v528, 4294901760
        %v530 = vsub.f32 %v528, %v529
        %v531 = vand.u32 %v530, 4294901760
        %532 = vmatpush1.msra.mxu0 %v531
        %533 = vmatprep.subr.mxu0 0.0
        %v534 = vand.u32 %v289, 4294901760
        %v535 = vsub.f32 %v289, %v534
        %v536 = vand.u32 %v535, 4294901760
        %v537 = vsub.f32 %v535, %v536
        %v538 = vand.u32 %v537, 4294901760
        %539 = vmatpush1.msra.mxu0 %v538
        %540 = vmatprep.subr.mxu0 0.0
        %v541 = vand.u32 %v290, 4294901760
        %v542 = vsub.f32 %v290, %v541
        %v543 = vand.u32 %v542, 4294901760
        %v544 = vsub.f32 %v542, %v543
        %v545 = vand.u32 %v544, 4294901760
        %546 = vmatpush1.msra.mxu0 %v545
        %547 = vmatprep.subr.mxu0 0.0
        %v548 = vand.u32 %v291, 4294901760
        %v549 = vsub.f32 %v291, %v548
        %v550 = vand.u32 %v549, 4294901760
        %v551 = vsub.f32 %v549, %v550
        %v552 = vand.u32 %v551, 4294901760
        %553 = vmatpush1.msra.mxu0 %v552
        %554 = vmatprep.subr.mxu0 0.0
        %v555 = vand.u32 %v292, 4294901760
        %v556 = vsub.f32 %v292, %v555
        %v557 = vand.u32 %v556, 4294901760
        %v558 = vsub.f32 %v556, %v557
        %v559 = vand.u32 %v558, 4294901760
        %560 = vmatpush1.msra.mxu0 %v559
        %561 = vmatprep.subr.mxu0 0.0
        %v562 = vand.u32 %v293, 4294901760
        %v563 = vsub.f32 %v293, %v562
        %v564 = vand.u32 %v563, 4294901760
        %v565 = vsub.f32 %v563, %v564
        %v566 = vand.u32 %v565, 4294901760
        %567 = vmatpush1.msra.mxu0 %v566
        %568 = vmatprep.subr.mxu0 0.0
        %v569 = vand.u32 %v294, 4294901760
        %v570 = vsub.f32 %v294, %v569
        %v571 = vand.u32 %v570, 4294901760
        %v572 = vsub.f32 %v570, %v571
        %v573 = vand.u32 %v572, 4294901760
        %574 = vmatpush1.msra.mxu0 %v573
        %575 = vmatprep.subr.mxu0 0.0
        %v576 = vand.u32 %v295, 4294901760
        %v577 = vsub.f32 %v295, %v576
        %v578 = vand.u32 %v577, 4294901760
        %v579 = vsub.f32 %v577, %v578
        %v580 = vand.u32 %v579, 4294901760
        %581 = vmatpush1.msra.mxu0 %v580
        %582 = vmatprep.subr.mxu0 0.0
        %v583 = vand.u32 %v296, 4294901760
        %v584 = vsub.f32 %v296, %v583
        %v585 = vand.u32 %v584, 4294901760
        %v586 = vsub.f32 %v584, %v585
        %v587 = vand.u32 %v586, 4294901760
        %588 = vmatpush1.msra.mxu0 %v587
        %589 = vmatprep.subr.mxu0 0.0
        %v590 = vand.u32 %v297, 4294901760
        %v591 = vsub.f32 %v297, %v590
        %v592 = vand.u32 %v591, 4294901760
        %v593 = vsub.f32 %v591, %v592
        %v594 = vand.u32 %v593, 4294901760
        %595 = vmatpush1.msra.mxu0 %v594
        %596 = vmatprep.subr.mxu0 0.0
        %v597 = vand.u32 %v298, 4294901760
        %v598 = vsub.f32 %v298, %v597
        %v599 = vand.u32 %v598, 4294901760
        %v600 = vsub.f32 %v598, %v599
        %v601 = vand.u32 %v600, 4294901760
        %602 = vmatpush1.msra.mxu0 %v601
        %603 = vmatprep.subr.mxu0 0.0
        %v604 = vand.u32 %v299, 4294901760
        %v605 = vsub.f32 %v299, %v604
        %v606 = vand.u32 %v605, 4294901760
        %v607 = vsub.f32 %v605, %v606
        %v608 = vand.u32 %v607, 4294901760
        %609 = vmatpush1.msra.mxu0 %v608
        %610 = vmatprep.subr.mxu0 0.0
        %v611 = vand.u32 %v300, 4294901760
        %v612 = vsub.f32 %v300, %v611
        %v613 = vand.u32 %v612, 4294901760
        %v614 = vsub.f32 %v612, %v613
        %v615 = vand.u32 %v614, 4294901760
        %616 = vmatpush1.msra.mxu0 %v615
        %617 = vmatprep.subr.mxu0 0.0
        %v618 = vand.u32 %v301, 4294901760
        %v619 = vsub.f32 %v301, %v618
        %v620 = vand.u32 %v619, 4294901760
        %v621 = vsub.f32 %v619, %v620
        %v622 = vand.u32 %v621, 4294901760
        %623 = vmatpush1.msra.mxu0 %v622
        %624 = vmatprep.subr.mxu0 0.0
        %v625 = vand.u32 %v302, 4294901760
        %v626 = vsub.f32 %v302, %v625
        %v627 = vand.u32 %v626, 4294901760
        %v628 = vsub.f32 %v626, %v627
        %v629 = vand.u32 %v628, 4294901760
        %630 = vmatpush1.msra.mxu0 %v629
        %631 = vmatprep.subr.mxu0 0.0
        %v632 = vand.u32 %v303, 4294901760
        %v633 = vsub.f32 %v303, %v632
        %v634 = vand.u32 %v633, 4294901760
        %v635 = vsub.f32 %v633, %v634
        %v636 = vand.u32 %v635, 4294901760
        %637 = vmatpush1.msra.mxu0 %v636
        %638 = vmatprep.subr.mxu0 0.0
        %v639 = vand.u32 %v304, 4294901760
        %v640 = vsub.f32 %v304, %v639
        %v641 = vand.u32 %v640, 4294901760
        %v642 = vsub.f32 %v640, %v641
        %v643 = vand.u32 %v642, 4294901760
        %644 = vmatpush1.msra.mxu0 %v643
        %v645 = vand.u32 %v307, 4294901760
        %646 = vmatprep.mubr.f32.mxu0 %v645
        %v647 = vand.u32 %v305, 4294901760
        %648 = vmatmul.mubr.f32.gmra.mrb[0].mxu0 %v647
        %v649 = vpop.f32.mrb[0].mxu0
        %v650 = vadd.f32 %v418, %v649
        %v651 = vpop.f32.mrb[0].mxu0
        %652 = vdwg.mxu0
        %653 = vmatprep.subr.mxu0 0.0
        %v654 = vand.u32 %v273, 4294901760
        %v655 = vsub.f32 %v273, %v654
        %656 = vmatpush1.msra.mxu0 %v655
        %657 = vmatprep.subr.mxu0 0.0
        %v658 = vand.u32 %v274, 4294901760
        %v659 = vsub.f32 %v274, %v658
        %660 = vmatpush1.msra.mxu0 %v659
        %661 = vmatprep.subr.mxu0 0.0
        %v662 = vand.u32 %v275, 4294901760
        %v663 = vsub.f32 %v275, %v662
        %664 = vmatpush1.msra.mxu0 %v663
        %665 = vmatprep.subr.mxu0 0.0
        %v666 = vand.u32 %v276, 4294901760
        %v667 = vsub.f32 %v276, %v666
        %668 = vmatpush1.msra.mxu0 %v667
        %669 = vmatprep.subr.mxu0 0.0
        %v670 = vand.u32 %v277, 4294901760
        %v671 = vsub.f32 %v277, %v670
        %672 = vmatpush1.msra.mxu0 %v671
        %673 = vmatprep.subr.mxu0 0.0
        %v674 = vand.u32 %v278, 4294901760
        %v675 = vsub.f32 %v278, %v674
        %676 = vmatpush1.msra.mxu0 %v675
        %677 = vmatprep.subr.mxu0 0.0
        %v678 = vand.u32 %v279, 4294901760
        %v679 = vsub.f32 %v279, %v678
        %680 = vmatpush1.msra.mxu0 %v679
        %681 = vmatprep.subr.mxu0 0.0
        %v682 = vand.u32 %v280, 4294901760
        %v683 = vsub.f32 %v280, %v682
        %684 = vmatpush1.msra.mxu0 %v683
        %685 = vmatprep.subr.mxu0 0.0
        %v686 = vand.u32 %v281, 4294901760
        %v687 = vsub.f32 %v281, %v686
        %688 = vmatpush1.msra.mxu0 %v687
        %689 = vmatprep.subr.mxu0 0.0
        %v690 = vand.u32 %v282, 4294901760
        %v691 = vsub.f32 %v282, %v690
        %692 = vmatpush1.msra.mxu0 %v691
        %693 = vmatprep.subr.mxu0 0.0
        %v694 = vand.u32 %v283, 4294901760
        %v695 = vsub.f32 %v283, %v694
        %696 = vmatpush1.msra.mxu0 %v695
        %697 = vmatprep.subr.mxu0 0.0
        %v698 = vand.u32 %v284, 4294901760
        %v699 = vsub.f32 %v284, %v698
        %700 = vmatpush1.msra.mxu0 %v699
        %701 = vmatprep.subr.mxu0 0.0
        %v702 = vand.u32 %v285, 4294901760
        %v703 = vsub.f32 %v285, %v702
        %704 = vmatpush1.msra.mxu0 %v703
        %705 = vmatprep.subr.mxu0 0.0
        %v706 = vand.u32 %v286, 4294901760
        %v707 = vsub.f32 %v286, %v706
        %708 = vmatpush1.msra.mxu0 %v707
        %709 = vmatprep.subr.mxu0 0.0
        %v710 = vand.u32 %v287, 4294901760
        %v711 = vsub.f32 %v287, %v710
        %712 = vmatpush1.msra.mxu0 %v711
        %713 = vmatprep.subr.mxu0 0.0
        %v714 = vand.u32 %v288, 4294901760
        %v715 = vsub.f32 %v288, %v714
        %716 = vmatpush1.msra.mxu0 %v715
        %717 = vmatprep.subr.mxu0 0.0
        %v718 = vand.u32 %v289, 4294901760
        %v719 = vsub.f32 %v289, %v718
        %720 = vmatpush1.msra.mxu0 %v719
        %721 = vmatprep.subr.mxu0 0.0
        %v722 = vand.u32 %v290, 4294901760
        %v723 = vsub.f32 %v290, %v722
        %724 = vmatpush1.msra.mxu0 %v723
        %725 = vmatprep.subr.mxu0 0.0
        %v726 = vand.u32 %v291, 4294901760
        %v727 = vsub.f32 %v291, %v726
        %728 = vmatpush1.msra.mxu0 %v727
        %729 = vmatprep.subr.mxu0 0.0
        %v730 = vand.u32 %v292, 4294901760
        %v731 = vsub.f32 %v292, %v730
        %732 = vmatpush1.msra.mxu0 %v731
        %733 = vmatprep.subr.mxu0 0.0
        %v734 = vand.u32 %v293, 4294901760
        %v735 = vsub.f32 %v293, %v734
        %736 = vmatpush1.msra.mxu0 %v735
        %737 = vmatprep.subr.mxu0 0.0
        %v738 = vand.u32 %v294, 4294901760
        %v739 = vsub.f32 %v294, %v738
        %740 = vmatpush1.msra.mxu0 %v739
        %741 = vmatprep.subr.mxu0 0.0
        %v742 = vand.u32 %v295, 4294901760
        %v743 = vsub.f32 %v295, %v742
        %744 = vmatpush1.msra.mxu0 %v743
        %745 = vmatprep.subr.mxu0 0.0
        %v746 = vand.u32 %v296, 4294901760
        %v747 = vsub.f32 %v296, %v746
        %748 = vmatpush1.msra.mxu0 %v747
        %749 = vmatprep.subr.mxu0 0.0
        %v750 = vand.u32 %v297, 4294901760
        %v751 = vsub.f32 %v297, %v750
        %752 = vmatpush1.msra.mxu0 %v751
        %753 = vmatprep.subr.mxu0 0.0
        %v754 = vand.u32 %v298, 4294901760
        %v755 = vsub.f32 %v298, %v754
        %756 = vmatpush1.msra.mxu0 %v755
        %757 = vmatprep.subr.mxu0 0.0
        %v758 = vand.u32 %v299, 4294901760
        %v759 = vsub.f32 %v299, %v758
        %760 = vmatpush1.msra.mxu0 %v759
        %761 = vmatprep.subr.mxu0 0.0
        %v762 = vand.u32 %v300, 4294901760
        %v763 = vsub.f32 %v300, %v762
        %764 = vmatpush1.msra.mxu0 %v763
        %765 = vmatprep.subr.mxu0 0.0
        %v766 = vand.u32 %v301, 4294901760
        %v767 = vsub.f32 %v301, %v766
        %768 = vmatpush1.msra.mxu0 %v767
        %769 = vmatprep.subr.mxu0 0.0
        %v770 = vand.u32 %v302, 4294901760
        %v771 = vsub.f32 %v302, %v770
        %772 = vmatpush1.msra.mxu0 %v771
        %773 = vmatprep.subr.mxu0 0.0
        %v774 = vand.u32 %v303, 4294901760
        %v775 = vsub.f32 %v303, %v774
        %776 = vmatpush1.msra.mxu0 %v775
        %777 = vmatprep.subr.mxu0 0.0
        %v778 = vand.u32 %v304, 4294901760
        %v779 = vsub.f32 %v304, %v778
        %780 = vmatpush1.msra.mxu0 %v779
        %v781 = vand.u32 %v307, 4294901760
        %v782 = vsub.f32 %v307, %v781
        %783 = vmatprep.mubr.f32.mxu0 %v782
        %v784 = vand.u32 %v305, 4294901760
        %v785 = vsub.f32 %v305, %v784
        %786 = vmatmul.mubr.f32.gmra.mrb[0].mxu0 %v785
        %v787 = vpop.f32.mrb[0].mxu0
        %v788 = vadd.f32 %v650, %v787
        %v789 = vpop.f32.mrb[0].mxu0
        %790 = vdwg.mxu0
        %791 = vmatprep.subr.mxu0 0.0
        %v792 = vand.u32 %v273, 4294901760
        %793 = vmatpush1.msra.mxu0 %v792
        %794 = vmatprep.subr.mxu0 0.0
        %v795 = vand.u32 %v274, 4294901760
        %796 = vmatpush1.msra.mxu0 %v795
        %797 = vmatprep.subr.mxu0 0.0
        %v798 = vand.u32 %v275, 4294901760
        %799 = vmatpush1.msra.mxu0 %v798
        %800 = vmatprep.subr.mxu0 0.0
        %v801 = vand.u32 %v276, 4294901760
        %802 = vmatpush1.msra.mxu0 %v801
        %803 = vmatprep.subr.mxu0 0.0
        %v804 = vand.u32 %v277, 4294901760
        %805 = vmatpush1.msra.mxu0 %v804
        %806 = vmatprep.subr.mxu0 0.0
        %v807 = vand.u32 %v278, 4294901760
        %808 = vmatpush1.msra.mxu0 %v807
        %809 = vmatprep.subr.mxu0 0.0
        %v810 = vand.u32 %v279, 4294901760
        %811 = vmatpush1.msra.mxu0 %v810
        %812 = vmatprep.subr.mxu0 0.0
        %v813 = vand.u32 %v280, 4294901760
        %814 = vmatpush1.msra.mxu0 %v813
        %815 = vmatprep.subr.mxu0 0.0
        %v816 = vand.u32 %v281, 4294901760
        %817 = vmatpush1.msra.mxu0 %v816
        %818 = vmatprep.subr.mxu0 0.0
        %v819 = vand.u32 %v282, 4294901760
        %820 = vmatpush1.msra.mxu0 %v819
        %821 = vmatprep.subr.mxu0 0.0
        %v822 = vand.u32 %v283, 4294901760
        %823 = vmatpush1.msra.mxu0 %v822
        %824 = vmatprep.subr.mxu0 0.0
        %v825 = vand.u32 %v284, 4294901760
        %826 = vmatpush1.msra.mxu0 %v825
        %827 = vmatprep.subr.mxu0 0.0
        %v828 = vand.u32 %v285, 4294901760
        %829 = vmatpush1.msra.mxu0 %v828
        %830 = vmatprep.subr.mxu0 0.0
        %v831 = vand.u32 %v286, 4294901760
        %832 = vmatpush1.msra.mxu0 %v831
        %833 = vmatprep.subr.mxu0 0.0
        %v834 = vand.u32 %v287, 4294901760
        %835 = vmatpush1.msra.mxu0 %v834
        %836 = vmatprep.subr.mxu0 0.0
        %v837 = vand.u32 %v288, 4294901760
        %838 = vmatpush1.msra.mxu0 %v837
        %839 = vmatprep.subr.mxu0 0.0
        %v840 = vand.u32 %v289, 4294901760
        %841 = vmatpush1.msra.mxu0 %v840
        %842 = vmatprep.subr.mxu0 0.0
        %v843 = vand.u32 %v290, 4294901760
        %844 = vmatpush1.msra.mxu0 %v843
        %845 = vmatprep.subr.mxu0 0.0
        %v846 = vand.u32 %v291, 4294901760
        %847 = vmatpush1.msra.mxu0 %v846
        %848 = vmatprep.subr.mxu0 0.0
        %v849 = vand.u32 %v292, 4294901760
        %850 = vmatpush1.msra.mxu0 %v849
        %851 = vmatprep.subr.mxu0 0.0
        %v852 = vand.u32 %v293, 4294901760
        %853 = vmatpush1.msra.mxu0 %v852
        %854 = vmatprep.subr.mxu0 0.0
        %v855 = vand.u32 %v294, 4294901760
        %856 = vmatpush1.msra.mxu0 %v855
        %857 = vmatprep.subr.mxu0 0.0
        %v858 = vand.u32 %v295, 4294901760
        %859 = vmatpush1.msra.mxu0 %v858
        %860 = vmatprep.subr.mxu0 0.0
        %v861 = vand.u32 %v296, 4294901760
        %862 = vmatpush1.msra.mxu0 %v861
        %863 = vmatprep.subr.mxu0 0.0
        %v864 = vand.u32 %v297, 4294901760
        %865 = vmatpush1.msra.mxu0 %v864
        %866 = vmatprep.subr.mxu0 0.0
        %v867 = vand.u32 %v298, 4294901760
        %868 = vmatpush1.msra.mxu0 %v867
        %869 = vmatprep.subr.mxu0 0.0
        %v870 = vand.u32 %v299, 4294901760
        %871 = vmatpush1.msra.mxu0 %v870
        %872 = vmatprep.subr.mxu0 0.0
        %v873 = vand.u32 %v300, 4294901760
        %874 = vmatpush1.msra.mxu0 %v873
        %875 = vmatprep.subr.mxu0 0.0
        %v876 = vand.u32 %v301, 4294901760
        %877 = vmatpush1.msra.mxu0 %v876
        %878 = vmatprep.subr.mxu0 0.0
        %v879 = vand.u32 %v302, 4294901760
        %880 = vmatpush1.msra.mxu0 %v879
        %881 = vmatprep.subr.mxu0 0.0
        %v882 = vand.u32 %v303, 4294901760
        %883 = vmatpush1.msra.mxu0 %v882
        %884 = vmatprep.subr.mxu0 0.0
        %v885 = vand.u32 %v304, 4294901760
        %886 = vmatpush1.msra.mxu0 %v885
        %v887 = vand.u32 %v307, 4294901760
        %v888 = vsub.f32 %v307, %v887
        %v889 = vand.u32 %v888, 4294901760
        %890 = vmatprep.mubr.f32.mxu0 %v889
        %v891 = vand.u32 %v305, 4294901760
        %v892 = vsub.f32 %v305, %v891
        %v893 = vand.u32 %v892, 4294901760
        %894 = vmatmul.mubr.f32.gmra.mrb[0].mxu0 %v893
        %v895 = vpop.f32.mrb[0].mxu0
        %v896 = vadd.f32 %v788, %v895
        %v897 = vpop.f32.mrb[0].mxu0
        %898 = vdwg.mxu0
        %899 = vmatprep.subr.mxu0 0.0
        %v900 = vand.u32 %v273, 4294901760
        %v901 = vsub.f32 %v273, %v900
        %v902 = vand.u32 %v901, 4294901760
        %903 = vmatpush1.msra.mxu0 %v902
        %904 = vmatprep.subr.mxu0 0.0
        %v905 = vand.u32 %v274, 4294901760
        %v906 = vsub.f32 %v274, %v905
        %v907 = vand.u32 %v906, 4294901760
        %908 = vmatpush1.msra.mxu0 %v907
        %909 = vmatprep.subr.mxu0 0.0
        %v910 = vand.u32 %v275, 4294901760
        %v911 = vsub.f32 %v275, %v910
        %v912 = vand.u32 %v911, 4294901760
        %913 = vmatpush1.msra.mxu0 %v912
        %914 = vmatprep.subr.mxu0 0.0
        %v915 = vand.u32 %v276, 4294901760
        %v916 = vsub.f32 %v276, %v915
        %v917 = vand.u32 %v916, 4294901760
        %918 = vmatpush1.msra.mxu0 %v917
        %919 = vmatprep.subr.mxu0 0.0
        %v920 = vand.u32 %v277, 4294901760
        %v921 = vsub.f32 %v277, %v920
        %v922 = vand.u32 %v921, 4294901760
        %923 = vmatpush1.msra.mxu0 %v922
        %924 = vmatprep.subr.mxu0 0.0
        %v925 = vand.u32 %v278, 4294901760
        %v926 = vsub.f32 %v278, %v925
        %v927 = vand.u32 %v926, 4294901760
        %928 = vmatpush1.msra.mxu0 %v927
        %929 = vmatprep.subr.mxu0 0.0
        %v930 = vand.u32 %v279, 4294901760
        %v931 = vsub.f32 %v279, %v930
        %v932 = vand.u32 %v931, 4294901760
        %933 = vmatpush1.msra.mxu0 %v932
        %934 = vmatprep.subr.mxu0 0.0
        %v935 = vand.u32 %v280, 4294901760
        %v936 = vsub.f32 %v280, %v935
        %v937 = vand.u32 %v936, 4294901760
        %938 = vmatpush1.msra.mxu0 %v937
        %939 = vmatprep.subr.mxu0 0.0
        %v940 = vand.u32 %v281, 4294901760
        %v941 = vsub.f32 %v281, %v940
        %v942 = vand.u32 %v941, 4294901760
        %943 = vmatpush1.msra.mxu0 %v942
        %944 = vmatprep.subr.mxu0 0.0
        %v945 = vand.u32 %v282, 4294901760
        %v946 = vsub.f32 %v282, %v945
        %v947 = vand.u32 %v946, 4294901760
        %948 = vmatpush1.msra.mxu0 %v947
        %949 = vmatprep.subr.mxu0 0.0
        %v950 = vand.u32 %v283, 4294901760
        %v951 = vsub.f32 %v283, %v950
        %v952 = vand.u32 %v951, 4294901760
        %953 = vmatpush1.msra.mxu0 %v952
        %954 = vmatprep.subr.mxu0 0.0
        %v955 = vand.u32 %v284, 4294901760
        %v956 = vsub.f32 %v284, %v955
        %v957 = vand.u32 %v956, 4294901760
        %958 = vmatpush1.msra.mxu0 %v957
        %959 = vmatprep.subr.mxu0 0.0
        %v960 = vand.u32 %v285, 4294901760
        %v961 = vsub.f32 %v285, %v960
        %v962 = vand.u32 %v961, 4294901760
        %963 = vmatpush1.msra.mxu0 %v962
        %964 = vmatprep.subr.mxu0 0.0
        %v965 = vand.u32 %v286, 4294901760
        %v966 = vsub.f32 %v286, %v965
        %v967 = vand.u32 %v966, 4294901760
        %968 = vmatpush1.msra.mxu0 %v967
        %969 = vmatprep.subr.mxu0 0.0
        %v970 = vand.u32 %v287, 4294901760
        %v971 = vsub.f32 %v287, %v970
        %v972 = vand.u32 %v971, 4294901760
        %973 = vmatpush1.msra.mxu0 %v972
        %974 = vmatprep.subr.mxu0 0.0
        %v975 = vand.u32 %v288, 4294901760
        %v976 = vsub.f32 %v288, %v975
        %v977 = vand.u32 %v976, 4294901760
        %978 = vmatpush1.msra.mxu0 %v977
        %979 = vmatprep.subr.mxu0 0.0
        %v980 = vand.u32 %v289, 4294901760
        %v981 = vsub.f32 %v289, %v980
        %v982 = vand.u32 %v981, 4294901760
        %983 = vmatpush1.msra.mxu0 %v982
        %984 = vmatprep.subr.mxu0 0.0
        %v985 = vand.u32 %v290, 4294901760
        %v986 = vsub.f32 %v290, %v985
        %v987 = vand.u32 %v986, 4294901760
        %988 = vmatpush1.msra.mxu0 %v987
        %989 = vmatprep.subr.mxu0 0.0
        %v990 = vand.u32 %v291, 4294901760
        %v991 = vsub.f32 %v291, %v990
        %v992 = vand.u32 %v991, 4294901760
        %993 = vmatpush1.msra.mxu0 %v992
        %994 = vmatprep.subr.mxu0 0.0
        %v995 = vand.u32 %v292, 4294901760
        %v996 = vsub.f32 %v292, %v995
        %v997 = vand.u32 %v996, 4294901760
        %998 = vmatpush1.msra.mxu0 %v997
        %999 = vmatprep.subr.mxu0 0.0
        %v1000 = vand.u32 %v293, 4294901760
        %v1001 = vsub.f32 %v293, %v1000
        %v1002 = vand.u32 %v1001, 4294901760
        %1003 = vmatpush1.msra.mxu0 %v1002
        %1004 = vmatprep.subr.mxu0 0.0
        %v1005 = vand.u32 %v294, 4294901760
        %v1006 = vsub.f32 %v294, %v1005
        %v1007 = vand.u32 %v1006, 4294901760
        %1008 = vmatpush1.msra.mxu0 %v1007
        %1009 = vmatprep.subr.mxu0 0.0
        %v1010 = vand.u32 %v295, 4294901760
        %v1011 = vsub.f32 %v295, %v1010
        %v1012 = vand.u32 %v1011, 4294901760
        %1013 = vmatpush1.msra.mxu0 %v1012
        %1014 = vmatprep.subr.mxu0 0.0
        %v1015 = vand.u32 %v296, 4294901760
        %v1016 = vsub.f32 %v296, %v1015
        %v1017 = vand.u32 %v1016, 4294901760
        %1018 = vmatpush1.msra.mxu0 %v1017
        %1019 = vmatprep.subr.mxu0 0.0
        %v1020 = vand.u32 %v297, 4294901760
        %v1021 = vsub.f32 %v297, %v1020
        %v1022 = vand.u32 %v1021, 4294901760
        %1023 = vmatpush1.msra.mxu0 %v1022
        %1024 = vmatprep.subr.mxu0 0.0
        %v1025 = vand.u32 %v298, 4294901760
        %v1026 = vsub.f32 %v298, %v1025
        %v1027 = vand.u32 %v1026, 4294901760
        %1028 = vmatpush1.msra.mxu0 %v1027
        %1029 = vmatprep.subr.mxu0 0.0
        %v1030 = vand.u32 %v299, 4294901760
        %v1031 = vsub.f32 %v299, %v1030
        %v1032 = vand.u32 %v1031, 4294901760
        %1033 = vmatpush1.msra.mxu0 %v1032
        %1034 = vmatprep.subr.mxu0 0.0
        %v1035 = vand.u32 %v300, 4294901760
        %v1036 = vsub.f32 %v300, %v1035
        %v1037 = vand.u32 %v1036, 4294901760
        %1038 = vmatpush1.msra.mxu0 %v1037
        %1039 = vmatprep.subr.mxu0 0.0
        %v1040 = vand.u32 %v301, 4294901760
        %v1041 = vsub.f32 %v301, %v1040
        %v1042 = vand.u32 %v1041, 4294901760
        %1043 = vmatpush1.msra.mxu0 %v1042
        %1044 = vmatprep.subr.mxu0 0.0
        %v1045 = vand.u32 %v302, 4294901760
        %v1046 = vsub.f32 %v302, %v1045
        %v1047 = vand.u32 %v1046, 4294901760
        %1048 = vmatpush1.msra.mxu0 %v1047
        %1049 = vmatprep.subr.mxu0 0.0
        %v1050 = vand.u32 %v303, 4294901760
        %v1051 = vsub.f32 %v303, %v1050
        %v1052 = vand.u32 %v1051, 4294901760
        %1053 = vmatpush1.msra.mxu0 %v1052
        %1054 = vmatprep.subr.mxu0 0.0
        %v1055 = vand.u32 %v304, 4294901760
        %v1056 = vsub.f32 %v304, %v1055
        %v1057 = vand.u32 %v1056, 4294901760
        %1058 = vmatpush1.msra.mxu0 %v1057
        %v1059 = vand.u32 %v307, 4294901760
        %1060 = vmatprep.mubr.f32.mxu0 %v1059
        %v1061 = vand.u32 %v305, 4294901760
        %1062 = vmatmul.mubr.f32.gmra.mrb[0].mxu0 %v1061
        %v1063 = vpop.f32.mrb[0].mxu0
        %v1064 = vadd.f32 %v896, %v1063
        %v1065 = vpop.f32.mrb[0].mxu0
        %1066 = vdwg.mxu0
        %1067 = vmatprep.subr.mxu0 0.0
        %v1068 = vand.u32 %v273, 4294901760
        %1069 = vmatpush1.msra.mxu0 %v1068
        %1070 = vmatprep.subr.mxu0 0.0
        %v1071 = vand.u32 %v274, 4294901760
        %1072 = vmatpush1.msra.mxu0 %v1071
        %1073 = vmatprep.subr.mxu0 0.0
        %v1074 = vand.u32 %v275, 4294901760
        %1075 = vmatpush1.msra.mxu0 %v1074
        %1076 = vmatprep.subr.mxu0 0.0
        %v1077 = vand.u32 %v276, 4294901760
        %1078 = vmatpush1.msra.mxu0 %v1077
        %1079 = vmatprep.subr.mxu0 0.0
        %v1080 = vand.u32 %v277, 4294901760
        %1081 = vmatpush1.msra.mxu0 %v1080
        %1082 = vmatprep.subr.mxu0 0.0
        %v1083 = vand.u32 %v278, 4294901760
        %1084 = vmatpush1.msra.mxu0 %v1083
        %1085 = vmatprep.subr.mxu0 0.0
        %v1086 = vand.u32 %v279, 4294901760
        %1087 = vmatpush1.msra.mxu0 %v1086
        %1088 = vmatprep.subr.mxu0 0.0
        %v1089 = vand.u32 %v280, 4294901760
        %1090 = vmatpush1.msra.mxu0 %v1089
        %1091 = vmatprep.subr.mxu0 0.0
        %v1092 = vand.u32 %v281, 4294901760
        %1093 = vmatpush1.msra.mxu0 %v1092
        %1094 = vmatprep.subr.mxu0 0.0
        %v1095 = vand.u32 %v282, 4294901760
        %1096 = vmatpush1.msra.mxu0 %v1095
        %1097 = vmatprep.subr.mxu0 0.0
        %v1098 = vand.u32 %v283, 4294901760
        %1099 = vmatpush1.msra.mxu0 %v1098
        %1100 = vmatprep.subr.mxu0 0.0
        %v1101 = vand.u32 %v284, 4294901760
        %1102 = vmatpush1.msra.mxu0 %v1101
        %1103 = vmatprep.subr.mxu0 0.0
        %v1104 = vand.u32 %v285, 4294901760
        %1105 = vmatpush1.msra.mxu0 %v1104
        %1106 = vmatprep.subr.mxu0 0.0
        %v1107 = vand.u32 %v286, 4294901760
        %1108 = vmatpush1.msra.mxu0 %v1107
        %1109 = vmatprep.subr.mxu0 0.0
        %v1110 = vand.u32 %v287, 4294901760
        %1111 = vmatpush1.msra.mxu0 %v1110
        %1112 = vmatprep.subr.mxu0 0.0
        %v1113 = vand.u32 %v288, 4294901760
        %1114 = vmatpush1.msra.mxu0 %v1113
        %1115 = vmatprep.subr.mxu0 0.0
        %v1116 = vand.u32 %v289, 4294901760
        %1117 = vmatpush1.msra.mxu0 %v1116
        %1118 = vmatprep.subr.mxu0 0.0
        %v1119 = vand.u32 %v290, 4294901760
        %1120 = vmatpush1.msra.mxu0 %v1119
        %1121 = vmatprep.subr.mxu0 0.0
        %v1122 = vand.u32 %v291, 4294901760
        %1123 = vmatpush1.msra.mxu0 %v1122
        %1124 = vmatprep.subr.mxu0 0.0
        %v1125 = vand.u32 %v292, 4294901760
        %1126 = vmatpush1.msra.mxu0 %v1125
        %1127 = vmatprep.subr.mxu0 0.0
        %v1128 = vand.u32 %v293, 4294901760
        %1129 = vmatpush1.msra.mxu0 %v1128
        %1130 = vmatprep.subr.mxu0 0.0
        %v1131 = vand.u32 %v294, 4294901760
        %1132 = vmatpush1.msra.mxu0 %v1131
        %1133 = vmatprep.subr.mxu0 0.0
        %v1134 = vand.u32 %v295, 4294901760
        %1135 = vmatpush1.msra.mxu0 %v1134
        %1136 = vmatprep.subr.mxu0 0.0
        %v1137 = vand.u32 %v296, 4294901760
        %1138 = vmatpush1.msra.mxu0 %v1137
        %1139 = vmatprep.subr.mxu0 0.0
        %v1140 = vand.u32 %v297, 4294901760
        %1141 = vmatpush1.msra.mxu0 %v1140
        %1142 = vmatprep.subr.mxu0 0.0
        %v1143 = vand.u32 %v298, 4294901760
        %1144 = vmatpush1.msra.mxu0 %v1143
        %1145 = vmatprep.subr.mxu0 0.0
        %v1146 = vand.u32 %v299, 4294901760
        %1147 = vmatpush1.msra.mxu0 %v1146
        %1148 = vmatprep.subr.mxu0 0.0
        %v1149 = vand.u32 %v300, 4294901760
        %1150 = vmatpush1.msra.mxu0 %v1149
        %1151 = vmatprep.subr.mxu0 0.0
        %v1152 = vand.u32 %v301, 4294901760
        %1153 = vmatpush1.msra.mxu0 %v1152
        %1154 = vmatprep.subr.mxu0 0.0
        %v1155 = vand.u32 %v302, 4294901760
        %1156 = vmatpush1.msra.mxu0 %v1155
        %1157 = vmatprep.subr.mxu0 0.0
        %v1158 = vand.u32 %v303, 4294901760
        %1159 = vmatpush1.msra.mxu0 %v1158
        %1160 = vmatprep.subr.mxu0 0.0
        %v1161 = vand.u32 %v304, 4294901760
        %1162 = vmatpush1.msra.mxu0 %v1161
        %v1163 = vand.u32 %v307, 4294901760
        %1164 = vmatprep.mubr.f32.mxu0 %v1163
        %v1165 = vand.u32 %v305, 4294901760
        %1166 = vmatmul.mubr.f32.gmra.mrb[0].mxu0 %v1165
        %v1167 = vpop.f32.mrb[0].mxu0
        %v1168 = vadd.f32 %v1064, %v1167
        %v1169 = vpop.f32.mrb[0].mxu0
        %1170 = vdwg.mxu0
        %v1171 = vmul.f32 %v1168, 0.015625
        %v1172 = vld [vmem:[%s2] sm:$0xff]
        %v1173 = vld [vmem:[%s2 + $0x8] sm:$0xff]
        %v1174 = vld [vmem:[%s2 + $0x10] sm:$0xff]
        %v1175 = vld [vmem:[%s2 + $0x18] sm:$0xff]
        %v1176 = vld [vmem:[%s2 + $0x20] sm:$0xff]
        %v1177 = vld [vmem:[%s2 + $0x28] sm:$0xff]
        %v1178 = vld [vmem:[%s2 + $0x30] sm:$0xff]
        %v1179 = vld [vmem:[%s2 + $0x38] sm:$0xff]
        %v1180 = vld [vmem:[%s2 + $0x40] sm:$0xff]
        %v1181 = vld [vmem:[%s2 + $0x48] sm:$0xff]
        %v1182 = vld [vmem:[%s2 + $0x50] sm:$0xff]
        %v1183 = vld [vmem:[%s2 + $0x58] sm:$0xff]
        %v1184 = vld [vmem:[%s2 + $0x60] sm:$0xff]
        %v1185 = vld [vmem:[%s2 + $0x68] sm:$0xff]
        %v1186 = vld [vmem:[%s2 + $0x70] sm:$0xff]
        %v1187 = vld [vmem:[%s2 + $0x78] sm:$0xff]
        %v1188 = vld [vmem:[%s3] sm:$0x1]
        %v1190 = vlaneseq
        %v1191 = vshrl.u32 %v1190, 7
        %v1192 = vsub.s32 0, %v1191
        %v1193 = vrot.slane %v1188, %v1192
        %1195 = vmatprep.subr.mxu0 0.0
        %1196 = vmatpush1.msra.mxu0 %v1172
        %1197 = vmatprep.subr.mxu0 0.0
        %1198 = vmatpush1.msra.mxu0 %v1173
        %1199 = vmatprep.subr.mxu0 0.0
        %1200 = vmatpush1.msra.mxu0 %v1174
        %1201 = vmatprep.subr.mxu0 0.0
        %1202 = vmatpush1.msra.mxu0 %v1175
        %1203 = vmatprep.subr.mxu0 0.0
        %1204 = vmatpush1.msra.mxu0 %v1176
        %1205 = vmatprep.subr.mxu0 0.0
        %1206 = vmatpush1.msra.mxu0 %v1177
        %1207 = vmatprep.subr.mxu0 0.0
        %1208 = vmatpush1.msra.mxu0 %v1178
        %1209 = vmatprep.subr.mxu0 0.0
        %1210 = vmatpush1.msra.mxu0 %v1179
        %1211 = vmatprep.subr.mxu0 0.0
        %1212 = vmatpush1.msra.mxu0 %v1180
        %1213 = vmatprep.subr.mxu0 0.0
        %1214 = vmatpush1.msra.mxu0 %v1181
        %1215 = vmatprep.subr.mxu0 0.0
        %1216 = vmatpush1.msra.mxu0 %v1182
        %1217 = vmatprep.subr.mxu0 0.0
        %1218 = vmatpush1.msra.mxu0 %v1183
        %1219 = vmatprep.subr.mxu0 0.0
        %1220 = vmatpush1.msra.mxu0 %v1184
        %1221 = vmatprep.subr.mxu0 0.0
        %1222 = vmatpush1.msra.mxu0 %v1185
        %1223 = vmatprep.subr.mxu0 0.0
        %1224 = vmatpush1.msra.mxu0 %v1186
        %1225 = vmatprep.subr.mxu0 0.0
        %1226 = vmatpush1.msra.mxu0 %v1187
        %1227 = vmatprep.subr.mxu0 0.0
        %1228 = vmatpush1.msra.mxu0 0.0
        %1229 = vmatprep.subr.mxu0 0.0
        %1230 = vmatpush1.msra.mxu0 0.0
        %1231 = vmatprep.subr.mxu0 0.0
        %1232 = vmatpush1.msra.mxu0 0.0
        %1233 = vmatprep.subr.mxu0 0.0
        %1234 = vmatpush1.msra.mxu0 0.0
        %1235 = vmatprep.subr.mxu0 0.0
        %1236 = vmatpush1.msra.mxu0 0.0
        %1237 = vmatprep.subr.mxu0 0.0
        %1238 = vmatpush1.msra.mxu0 0.0
        %1239 = vmatprep.subr.mxu0 0.0
        %1240 = vmatpush1.msra.mxu0 0.0
        %1241 = vmatprep.subr.mxu0 0.0
        %1242 = vmatpush1.msra.mxu0 0.0
        %1243 = vmatprep.subr.mxu0 0.0
        %1244 = vmatpush1.msra.mxu0 0.0
        %1245 = vmatprep.subr.mxu0 0.0
        %1246 = vmatpush1.msra.mxu0 0.0
        %1247 = vmatprep.subr.mxu0 0.0
        %1248 = vmatpush1.msra.mxu0 0.0
        %1249 = vmatprep.subr.mxu0 0.0
        %1250 = vmatpush1.msra.mxu0 0.0
        %1251 = vmatprep.subr.mxu0 0.0
        %1252 = vmatpush1.msra.mxu0 0.0
        %1253 = vmatprep.subr.mxu0 0.0
        %1254 = vmatpush1.msra.mxu0 0.0
        %1255 = vmatprep.subr.mxu0 0.0
        %1256 = vmatpush1.msra.mxu0 0.0
        %1257 = vmatprep.subr.mxu0 0.0
        %1258 = vmatpush1.msra.mxu0 0.0
        %1259 = vmatprep.mubr.f32.mxu0 0.0
        %1260 = vmatmul.mubr.f32.gmra.mrb[0].mxu0 %v1171
        %v1261 = vpop.f32.mrb[0].mxu0
        %v1262 = vadd.f32 %v1193, %v1261
        %v1263 = vpop.f32.mrb[0].mxu0
        %1264 = vdwg.mxu0
        %v1265 = vmax.f32 %v1262, 0.0
        %v1266 = vld [vmem:[%s4] sm:$0xff]
        %v1267 = vld [vmem:[%s5] sm:$0x1]
        %v1269 = vlaneseq
        %v1270 = vshrl.u32 %v1269, 7
        %v1271 = vsub.s32 0, %v1270
        %v1272 = vrot.slane %v1267, %v1271
        %vm1274 = vcmask 64512
        %v1276 = vsel %vm1274, %v1265, 0
        %1278 = vmatprep.subr.mxu0 0.0
        %1279 = vmatpush1.msra.mxu0 %v1266
        %1280 = vmatprep.subr.mxu0 0.0
        %1281 = vmatpush1.msra.mxu0 0.0
        %1282 = vmatprep.subr.mxu0 0.0
        %1283 = vmatpush1.msra.mxu0 0.0
        %1284 = vmatprep.subr.mxu0 0.0
        %1285 = vmatpush1.msra.mxu0 0.0
        %1286 = vmatprep.subr.mxu0 0.0
        %1287 = vmatpush1.msra.mxu0 0.0
        %1288 = vmatprep.subr.mxu0 0.0
        %1289 = vmatpush1.msra.mxu0 0.0
        %1290 = vmatprep.subr.mxu0 0.0
        %1291 = vmatpush1.msra.mxu0 0.0
        %1292 = vmatprep.subr.mxu0 0.0
        %1293 = vmatpush1.msra.mxu0 0.0
        %1294 = vmatprep.subr.mxu0 0.0
        %1295 = vmatpush1.msra.mxu0 0.0
        %1296 = vmatprep.subr.mxu0 0.0
        %1297 = vmatpush1.msra.mxu0 0.0
        %1298 = vmatprep.subr.mxu0 0.0
        %1299 = vmatpush1.msra.mxu0 0.0
        %1300 = vmatprep.subr.mxu0 0.0
        %1301 = vmatpush1.msra.mxu0 0.0
        %1302 = vmatprep.subr.mxu0 0.0
        %1303 = vmatpush1.msra.mxu0 0.0
        %1304 = vmatprep.subr.mxu0 0.0
        %1305 = vmatpush1.msra.mxu0 0.0
        %1306 = vmatprep.subr.mxu0 0.0
        %1307 = vmatpush1.msra.mxu0 0.0
        %1308 = vmatprep.subr.mxu0 0.0
        %1309 = vmatpush1.msra.mxu0 0.0
        %1310 = vmatprep.subr.mxu0 0.0
        %1311 = vmatpush1.msra.mxu0 0.0
        %1312 = vmatprep.subr.mxu0 0.0
        %1313 = vmatpush1.msra.mxu0 0.0
        %1314 = vmatprep.subr.mxu0 0.0
        %1315 = vmatpush1.msra.mxu0 0.0
        %1316 = vmatprep.subr.mxu0 0.0
        %1317 = vmatpush1.msra.mxu0 0.0
        %1318 = vmatprep.subr.mxu0 0.0
        %1319 = vmatpush1.msra.mxu0 0.0
        %1320 = vmatprep.subr.mxu0 0.0
        %1321 = vmatpush1.msra.mxu0 0.0
        %1322 = vmatprep.subr.mxu0 0.0
        %1323 = vmatpush1.msra.mxu0 0.0
        %1324 = vmatprep.subr.mxu0 0.0
        %1325 = vmatpush1.msra.mxu0 0.0
        %1326 = vmatprep.subr.mxu0 0.0
        %1327 = vmatpush1.msra.mxu0 0.0
        %1328 = vmatprep.subr.mxu0 0.0
        %1329 = vmatpush1.msra.mxu0 0.0
        %1330 = vmatprep.subr.mxu0 0.0
        %1331 = vmatpush1.msra.mxu0 0.0
        %1332 = vmatprep.subr.mxu0 0.0
        %1333 = vmatpush1.msra.mxu0 0.0
        %1334 = vmatprep.subr.mxu0 0.0
        %1335 = vmatpush1.msra.mxu0 0.0
        %1336 = vmatprep.subr.mxu0 0.0
        %1337 = vmatpush1.msra.mxu0 0.0
        %1338 = vmatprep.subr.mxu0 0.0
        %1339 = vmatpush1.msra.mxu0 0.0
        %1340 = vmatprep.subr.mxu0 0.0
        %1341 = vmatpush1.msra.mxu0 0.0
        %1342 = vmatprep.mubr.f32.mxu0 0.0
        %1343 = vmatmul.mubr.f32.gmra.mrb[0].mxu0 %v1276
        %v1344 = vpop.f32.mrb[0].mxu0
        %v1345 = vadd.f32 %v1272, %v1344
        %v1346 = vpop.f32.mrb[0].mxu0
        %1347 = vdwg.mxu0
        %v1348 = vxor.u32 %v1345, 2147483648
        %v1349 = vmul.f32 %v1348, 1.442695
        %v1350 = vpow.pop %v1349
        %v1351 = vadd.f32 %v1350, 1.0
        %v1352 = vrcp.pop %v1351
        %v1353 = vmul.f32 1.0, %v1352
        %v1356 = vunpack.c.l.s4 1966171168
        %v1357 = vunpack.c.0.s8 %v1356
        %v1358 = vlaneseq
        %v1359 = vshrl.u32 %v1358, 7
        %v1360 = vsub.s32 %v1357, %v1359
        %v1361 = vrot.slane %v1353, %v1360
        %v1362 = vcombine.high %v1361, %v1361
        %v1364 = vunpack.c.l.s4 1966171168
        %v1365 = vunpack.c.0.s8 %v1364
        %v1366 = vlaneseq
        %v1367 = vshrl.u32 %v1366, 7
        %v1368 = vsub.s32 %v1365, %v1367
        %v1369 = vrot.slane %v1361, %v1368
        %v1371 = vunpack.c.l.s4 1966171168
        %v1372 = vunpack.c.0.s8 %v1371
        %v1373 = vlaneseq
        %v1374 = vshrl.u32 %v1373, 7
        %v1375 = vsub.s32 %v1372, %v1374
        %v1376 = vrot.slane %v1362, %v1375
        %v1377 = vcombine.high %v1369, %v1369
        %v1378 = vcombine.high %v1376, %v1376
        %v1379 = vlaneseq
        %v1380 = vshrl.u32 %v1379, 7
        %v1381 = vsub.s32 0, %v1380
        %v1382 = vrot.slane %v1369, %v1381
        %v1383 = vlaneseq
        %v1384 = vshrl.u32 %v1383, 7
        %v1385 = vsub.s32 0, %v1384
        %v1386 = vrot.slane %v1376, %v1385
        %v1387 = vlaneseq
        %v1388 = vshrl.u32 %v1387, 7
        %v1389 = vsub.s32 0, %v1388
        %v1390 = vrot.slane %v1377, %v1389
        %v1391 = vlaneseq
        %v1392 = vshrl.u32 %v1391, 7
        %v1393 = vsub.s32 0, %v1392
        %v1394 = vrot.slane %v1378, %v1393
        %v1399 = vmul.f32 %v273, %v1382
        %v1400 = vmul.f32 %v274, %v1382
        %v1401 = vmul.f32 %v275, %v1382
        %v1402 = vmul.f32 %v276, %v1382
        %v1403 = vmul.f32 %v277, %v1382
        %v1404 = vmul.f32 %v278, %v1382
        %v1405 = vmul.f32 %v279, %v1382
        %v1406 = vmul.f32 %v280, %v1382
        %v1407 = vmul.f32 %v281, %v1386
        %v1408 = vmul.f32 %v282, %v1386
        %v1409 = vmul.f32 %v283, %v1386
        %v1410 = vmul.f32 %v284, %v1386
        %v1411 = vmul.f32 %v285, %v1386
        %v1412 = vmul.f32 %v286, %v1386
        %v1413 = vmul.f32 %v287, %v1386
        %v1414 = vmul.f32 %v288, %v1386
        %v1415 = vmul.f32 %v289, %v1390
        %v1416 = vmul.f32 %v290, %v1390
        %v1417 = vmul.f32 %v291, %v1390
        %v1418 = vmul.f32 %v292, %v1390
        %v1419 = vmul.f32 %v293, %v1390
        %v1420 = vmul.f32 %v294, %v1390
        %v1421 = vmul.f32 %v295, %v1390
        %v1422 = vmul.f32 %v296, %v1390
        %v1423 = vmul.f32 %v297, %v1394
        %v1424 = vmul.f32 %v298, %v1394
        %v1425 = vmul.f32 %v299, %v1394
        %v1426 = vmul.f32 %v300, %v1394
        %v1427 = vmul.f32 %v301, %v1394
        %v1428 = vmul.f32 %v302, %v1394
        %v1429 = vmul.f32 %v303, %v1394
        %v1430 = vmul.f32 %v304, %v1394
        %1431 = vst [vmem:[%s270] sm:$0xff] %v1399
        %1432 = vst [vmem:[%s270 + $0x8] sm:$0xff] %v1400
        %1433 = vst [vmem:[%s270 + $0x10] sm:$0xff] %v1401
        %1434 = vst [vmem:[%s270 + $0x18] sm:$0xff] %v1402
        %1435 = vst [vmem:[%s270 + $0x20] sm:$0xff] %v1403
        %1436 = vst [vmem:[%s270 + $0x28] sm:$0xff] %v1404
        %1437 = vst [vmem:[%s270 + $0x30] sm:$0xff] %v1405
        %1438 = vst [vmem:[%s270 + $0x38] sm:$0xff] %v1406
        %1439 = vst [vmem:[%s270 + $0x40] sm:$0xff] %v1407
        %1440 = vst [vmem:[%s270 + $0x48] sm:$0xff] %v1408
        %1441 = vst [vmem:[%s270 + $0x50] sm:$0xff] %v1409
        %1442 = vst [vmem:[%s270 + $0x58] sm:$0xff] %v1410
        %1443 = vst [vmem:[%s270 + $0x60] sm:$0xff] %v1411
        %1444 = vst [vmem:[%s270 + $0x68] sm:$0xff] %v1412
        %1445 = vst [vmem:[%s270 + $0x70] sm:$0xff] %v1413
        %1446 = vst [vmem:[%s270 + $0x78] sm:$0xff] %v1414
        %1447 = vst [vmem:[%s270 + $0x80] sm:$0xff] %v1415
        %1448 = vst [vmem:[%s270 + $0x88] sm:$0xff] %v1416
        %1449 = vst [vmem:[%s270 + $0x90] sm:$0xff] %v1417
        %1450 = vst [vmem:[%s270 + $0x98] sm:$0xff] %v1418
        %1451 = vst [vmem:[%s270 + $0xa0] sm:$0xff] %v1419
        %1452 = vst [vmem:[%s270 + $0xa8] sm:$0xff] %v1420
        %1453 = vst [vmem:[%s270 + $0xb0] sm:$0xff] %v1421
        %1454 = vst [vmem:[%s270 + $0xb8] sm:$0xff] %v1422
        %1455 = vst [vmem:[%s270 + $0xc0] sm:$0xff] %v1423
        %1456 = vst [vmem:[%s270 + $0xc8] sm:$0xff] %v1424
        %1457 = vst [vmem:[%s270 + $0xd0] sm:$0xff] %v1425
        %1458 = vst [vmem:[%s270 + $0xd8] sm:$0xff] %v1426
        %1459 = vst [vmem:[%s270 + $0xe0] sm:$0xff] %v1427
        %1460 = vst [vmem:[%s270 + $0xe8] sm:$0xff] %v1428
        %1461 = vst [vmem:[%s270 + $0xf0] sm:$0xff] %v1429
        %1462 = vst [vmem:[%s270 + $0xf8] sm:$0xff] %v1430
        %s1463 = sand.u32 %s162, 1
        %s1464 = scalar_lea.sflag [#allocation4], %s1463
        %s1465 = sand.u32 %s162, 1
        %s1466 = smul.addr %s1465, 256
        %s1467 = scalar_lea.vmem [#allocation5], %s1466
        // Predicated region
        $region49: #{tpu_custom_call.1} parent=43 // pred_check
          %p1468 = pneg %p172
        $region50: #{tpu_custom_call.1} parent=43 // pred_check_branch
          %1470 = sbr.rel (%p1468) target = $region52
        $region51: #{tpu_custom_call.1} parent=43 // pred_region
          %s1471 = smul.u32 4, %s23
          %s1473 = ssub.s32 4096, 4096
          %1474 = vsyncadd %s1464, %s1473
          %s1475 = smul.addr %s1471, 8
          %s1476 = smul.addr %s1475, 128
          %s1477 = scalar_lea.hbm %s6, %s1476
          %s1478 = sshll.u32 %s1467, 4
          %s1479 = int_to_ptr.vmem [resolvable:$true] %s1478
          %1484 = dma.vmem_to_hbm [thread:$0]  %s1479, 4096, %s1477, %s1464, 128, 128, 8
        $region52: #{tpu_custom_call.1} parent=43 // pred_fallthru
          _
      $region44: #{tpu_custom_call.1} parent=5 // pred_fallthru
        _
      %p1485 = scmp.le.s32.totalorder 2, %s18
      // Predicated region
      $region53: #{tpu_custom_call.1} parent=5 // pred_check
        %p1486 = pneg %p1485
      $region54: #{tpu_custom_call.1} parent=5 // pred_check_branch
        %1488 = sbr.rel (%p1486) target = $region56
      $region55: #{tpu_custom_call.1} parent=5 // pred_region
        %s1489 = ssub.s32 %s18, 2
        // Predicated region
        $region57: #{tpu_custom_call.1} parent=55 // pred_check
          %p1490 = pneg %p178
        $region58: #{tpu_custom_call.1} parent=55 // pred_check_branch
          %1492 = sbr.rel (%p1490) target = $region60
        $region59: #{tpu_custom_call.1} parent=55 // pred_region
          %s1493 = sand.u32 %s163, 1
          %s1494 = scalar_lea.sflag [#allocation4], %s1493
          %s1495 = sand.u32 %s163, 1
          %s1496 = smul.addr %s1495, 256
          %s1497 = scalar_lea.vmem [#allocation5], %s1496
          %1498 = dma.done %s1494, 4096
        $region60: #{tpu_custom_call.1} parent=55 // pred_fallthru
          _
      $region56: #{tpu_custom_call.1} parent=5 // pred_fallthru
        _
    $region6: #{tpu_custom_call.1} parent=1 // loop_footer
      %s22 = sadd.s32 1, %s18
    $region7: #{tpu_custom_call.1} parent=1 // loop_footer_branch
      %17 = sbr.rel target = $region3
    $region8: #{tpu_custom_call.1} parent=1 // loop_exit
      _
    %1499 = vsyncpa [#allocation3], 1
    %s1500 = scalar_lea.sflag [#allocation3], 1
    %1501 = vsyncpa %s1500, 1
    %1502 = vsyncpa [#allocation4], 1
    %s1503 = scalar_lea.sflag [#allocation4], 1
    %1504 = vsyncpa %s1503, 1

</llo_original>
